<compile_context>
chip_gen: v7x
topology: tpu7x:2x2x1
jax: 0.10.0
libtpu: 0.0.40
codegen_flags: <defaults>
</compile_context>

<pallas_src>
import functools

import jax
import jax.numpy as jnp
from jax.experimental import pallas as pl
from jax.experimental.pallas import tpu as pltpu

LANE = 128      # lane-dense output width: pad Cout up to a multiple of this
K3 = 27         # 3x3x3 taps
BN_EPS = 1e-5


def _round_up(a, m):
    return (a + m - 1) // m * m


# ----------------------------- Pallas kernels --------------------------------

def _matmul_bias_relu_kernel(x_ref, w_ref, bias_ref, o_ref):
    # x: (tm, K) bf16, w: (K, C_pad) bf16 -> f32 accumulation on the MXU.
    y = jnp.dot(x_ref[...], w_ref[...], preferred_element_type=jnp.float32)
    o_ref[...] = jnp.maximum(y + bias_ref[...], 0.0)            # folded-BN bias + ReLU


def _matmul_bias_relu_res_kernel(x_ref, w_ref, bias_ref, skip_ref, o_ref):
    y = jnp.dot(x_ref[...], w_ref[...], preferred_element_type=jnp.float32)
    o_ref[...] = skip_ref[...] + jnp.maximum(y + bias_ref[...], 0.0)   # residual add


def conv_bn_relu_pallas(x, w, bias, skip=None, *, tm):
    """Fused im2col-matmul + folded-BN bias + ReLU [+ residual].

    x    : [n_pad, K]     bf16  (rows padded to a multiple of tm)
    w    : [K, C_pad]     bf16  (BN scale folded in, Cout zero-padded to C_pad lanes)
    bias : [1, C_pad]     f32
    skip : [n_pad, C_pad] f32   (aliased to the output buffer -> in-place residual)
    """
    n_pad, k = x.shape
    c_pad = w.shape[1]
    assert n_pad % tm == 0 and c_pad % LANE == 0
    grid = (n_pad // tm,)

    in_specs = [
        pl.BlockSpec((tm, k), lambda i: (i, 0)),
        pl.BlockSpec((k, c_pad), lambda i: (0, 0)),
        pl.BlockSpec((1, c_pad), lambda i: (0, 0)),
    ]
    args = [x, w, bias]
    io_aliases = {}
    if skip is None:
        kernel = _matmul_bias_relu_kernel
    else:
        in_specs.append(pl.BlockSpec((tm, c_pad), lambda i: (i, 0)))
        args.append(skip)
        kernel = _matmul_bias_relu_res_kernel
        io_aliases = {3: 0}   # write the residual sum in place of the skip HBM buffer

    # Explicit VMEM budget: double-buffered tiles + resident params, generous headroom,
    # but capped well inside v7x's 64 MiB physical VMEM.
    need = 2 * (tm * k * 2 + k * c_pad * 2 + c_pad * 4 + tm * c_pad * 4)
    if skip is not None:
        need += 2 * tm * c_pad * 4
    vmem_limit = int(min(48 * 2**20, max(32 * 2**20, 2 * need)))

    return pl.pallas_call(
        kernel,
        out_shape=jax.ShapeDtypeStruct((n_pad, c_pad), jnp.float32),
        grid_spec=pltpu.PrefetchScalarGridSpec(
            num_scalar_prefetch=0,
            grid=grid,
            in_specs=in_specs,
            out_specs=pl.BlockSpec((tm, c_pad), lambda i: (i, 0)),
        ),
        compiler_params=pltpu.CompilerParams(
            dimension_semantics=("parallel",),
            vmem_limit_bytes=vmem_limit),
        input_output_aliases=io_aliases,
    )(*args)


# ------------------------------ JAX glue --------------------------------------

def build_rulebook(coords, grid_dhw):
    """Sparse submanifold-conv rulebook via sorted coordinate keys (no dense grid).

    Returns [27, N] int32 row indices into the feature matrix; N is the "inactive
    neighbor" sentinel (points at an appended zero row)."""
    d, h, w = grid_dhw
    n = coords.shape[0]
    b = coords[:, 0].astype(jnp.int32)
    z = coords[:, 1].astype(jnp.int32)
    y = coords[:, 2].astype(jnp.int32)
    x = coords[:, 3].astype(jnp.int32)
    key = ((b * d + z) * h + y) * w + x
    order = jnp.argsort(key)
    key_sorted = key[order]

    offsets = jnp.array([(dz, dy, dx) for dz in (-1, 0, 1)
                         for dy in (-1, 0, 1) for dx in (-1, 0, 1)], jnp.int32)  # [27,3]
    nz = z[None, :] + offsets[:, 0:1]
    ny = y[None, :] + offsets[:, 1:2]
    nx = x[None, :] + offsets[:, 2:3]
    in_range = ((nz >= 0) & (nz < d) & (ny >= 0) & (ny < h) & (nx >= 0) & (nx < w))
    nkey = ((b[None, :] * d + nz) * h + ny) * w + nx
    pos = jnp.clip(jnp.searchsorted(key_sorted, nkey), 0, n - 1)
    found = in_range & (key_sorted[pos] == nkey)
    return jnp.where(found, order[pos], n).astype(jnp.int32)     # [27, N]


def gather_im2col(src_feats, rulebook):
    """Gather 3x3x3 neighborhoods: [N, C] -> [N, 27*C]; inactive neighbors are 0."""
    # TODO(synk): for very large N, move this gather into the kernel (scalar-prefetched
    #             per-tap row indices + 27 tap-wise accumulated matmuls) to avoid writing
    #             the 27x-inflated im2col matrix to HBM and re-reading it.
    n, c = src_feats.shape
    src = jnp.concatenate([src_feats, jnp.zeros((1, c), src_feats.dtype)], axis=0)
    g = jnp.take(src, rulebook, axis=0)                 # [27, N, C]
    return jnp.transpose(g, (1, 0, 2)).reshape(n, K3 * c)


def fold_bn_params(w, bn, c_pad, eps=BN_EPS):
    """Fold eval-mode BatchNorm into the conv weight/bias; pad Cout to c_pad lanes."""
    # TODO(synk): BatchNorm uses eval-mode running statistics; train-mode batch stats
    #             over active voxels are not implemented here.
    gamma, beta, mean, var = bn
    scale = gamma / jnp.sqrt(var + eps)
    bias = beta - mean * scale
    c_out = w.shape[1]
    w_fused = jnp.pad(w * scale[None, :], ((0, 0), (0, c_pad - c_out))).astype(jnp.bfloat16)
    bias = jnp.pad(bias, (0, c_pad - c_out)).astype(jnp.float32)[None, :]
    return w_fused, bias


def _choose_tm(n, tm_max=512):
    # Bigger tiles amortize the ~0.35us/grid-step overhead; keep >= 2 tiles so the
    # "parallel" grid axis can shard across both v7x TensorCores.
    return int(min(tm_max, max(128, _round_up(pl.cdiv(n, 2), 128))))


def resblock_forward(feats, coords, params, grid_dhw, tm_max=512):
    """x_net = relu(bn1(conv1(x))); out = x_net + relu(bn2(conv2(x_net))). Same sparsity."""
    n, _ = feats.shape
    out_dim = params["w1"].shape[1]
    c_pad = _round_up(out_dim, LANE)
    tm = _choose_tm(n, tm_max)
    n_pad = _round_up(n, tm)

    # Both convs use the same indice_key in the torch module -> one shared rulebook.
    rulebook = build_rulebook(coords, grid_dhw)

    w1, b1 = fold_bn_params(params["w1"], params["bn1"], c_pad)
    w2, b2 = fold_bn_params(params["w2"], params["bn2"], c_pad)

    # --- net = SubMConv3d(in->out) + BN + ReLU (emitted already tm-padded, 128-lane wide)
    col1 = gather_im2col(feats.astype(jnp.bfloat16), rulebook)
    col1 = jnp.pad(col1, ((0, n_pad - n), (0, 0)))
    x_net_pad = conv_bn_relu_pallas(col1, w1, b1, tm=tm)          # [n_pad, c_pad] f32

    # --- res = SubMConv3d(out->out) + BN + ReLU; residual added in-kernel, in place of skip
    src2 = x_net_pad[:n, :out_dim].astype(jnp.bfloat16)
    col2 = gather_im2col(src2, rulebook)
    col2 = jnp.pad(col2, ((0, n_pad - n), (0, 0)))
    out_pad = conv_bn_relu_pallas(col2, w2, b2, skip=x_net_pad, tm=tm)

    return out_pad[:n, :out_dim], coords     # same sparsity pattern (replace_feature)


# --------------------------- references (pure JAX) -----------------------------

def submconv_im2col_dense(feats, coords, grid_dhw, batch_size):
    """Original dense-grid im2col (only used to cross-check the sparse rulebook)."""
    d, h, w = grid_dhw
    c = feats.shape[1]
    dense = jnp.zeros((batch_size, d + 2, h + 2, w + 2, c), feats.dtype)
    b = coords[:, 0]
    z = coords[:, 1] + 1
    y = coords[:, 2] + 1
    x = coords[:, 3] + 1
    dense = dense.at[b, z, y, x].set(feats)
    cols = [dense[b, z + dz, y + dy, x + dx]
            for dz in (-1, 0, 1) for dy in (-1, 0, 1) for dx in (-1, 0, 1)]
    return jnp.stack(cols, axis=1).reshape(feats.shape[0], K3 * c)


def resblock_reference(feats, coords, params, grid_dhw):
    """Plain-JAX reference at the same precision (bf16 matmul operands, f32 accumulate)."""
    out_dim = params["w1"].shape[1]
    c_pad = _round_up(out_dim, LANE)
    rb = build_rulebook(coords, grid_dhw)
    w1, b1 = fold_bn_params(params["w1"], params["bn1"], c_pad)
    w2, b2 = fold_bn_params(params["w2"], params["bn2"], c_pad)
    col1 = gather_im2col(feats.astype(jnp.bfloat16), rb).astype(jnp.float32)
    x_net = jnp.maximum(col1 @ w1.astype(jnp.float32) + b1, 0.0)[:, :out_dim]
    col2 = gather_im2col(x_net.astype(jnp.bfloat16), rb).astype(jnp.float32)
    res = jnp.maximum(col2 @ w2.astype(jnp.float32) + b2, 0.0)[:, :out_dim]
    return x_net + res


# --------------------------------- main ----------------------------------------

if __name__ == "__main__":
    key = jax.random.PRNGKey(0)
    B = 2
    D = H = W = 8
    IN_DIM, OUT_DIM, K = 4, 8, 3
    N_PER_BATCH = 100

    # deterministic active voxel coordinates (unique per batch)
    k_coord, k_feat, k_w1, k_w2 = jax.random.split(key, 4)
    coords_list = []
    for b in range(B):
        flat = jax.random.permutation(jax.random.fold_in(k_coord, b), D * H * W)[:N_PER_BATCH]
        z, rem = flat // (H * W), flat % (H * W)
        y, x = rem // W, rem % W
        coords_list.append(jnp.stack([jnp.full_like(z, b), z, y, x], axis=1))
    coords = jnp.concatenate(coords_list, axis=0).astype(jnp.int32)   # [N, 4]
    N = coords.shape[0]

    feats = jax.random.normal(k_feat, (N, IN_DIM), dtype=jnp.float32)  # [N, Cin]

    # deterministic parameters (SubMConv3d bias=False; BN in eval mode)
    w1 = 0.1 * jax.random.normal(k_w1, (K * K * K, IN_DIM, OUT_DIM), jnp.float32)
    w2 = 0.1 * jax.random.normal(k_w2, (K * K * K, OUT_DIM, OUT_DIM), jnp.float32)
    params = {
        "w1": w1.reshape(K * K * K * IN_DIM, OUT_DIM),
        "w2": w2.reshape(K * K * K * OUT_DIM, OUT_DIM),
        "bn1": (1.0 + 0.1 * jnp.arange(OUT_DIM, dtype=jnp.float32),   # gamma
                0.05 * jnp.arange(OUT_DIM, dtype=jnp.float32),        # beta
                0.01 * jnp.arange(OUT_DIM, dtype=jnp.float32),        # running_mean
                1.0 + 0.02 * jnp.arange(OUT_DIM, dtype=jnp.float32)), # running_var
        "bn2": (1.0 - 0.05 * jnp.arange(OUT_DIM, dtype=jnp.float32),
                -0.03 * jnp.arange(OUT_DIM, dtype=jnp.float32),
                0.02 * jnp.arange(OUT_DIM, dtype=jnp.float32),
                1.0 + 0.01 * jnp.arange(OUT_DIM, dtype=jnp.float32)),
    }

    out_feats, out_coords = jax.jit(
        functools.partial(resblock_forward, grid_dhw=(D, H, W))
    )(feats, coords, params)
    out_feats = jax.block_until_ready(out_feats)

    # 1) sparse rulebook gather must reproduce the dense-grid im2col exactly
    col_dense = submconv_im2col_dense(feats, coords, (D, H, W), B)
    col_rb = gather_im2col(feats, build_rulebook(coords, (D, H, W)))
    assert bool(jnp.array_equal(col_dense, col_rb))

    # 2) fused Pallas kernels vs plain-JAX reference at matching (bf16-operand) precision
    ref = resblock_reference(feats, coords, params, (D, H, W))
    assert out_feats.shape == (N, OUT_DIM)
    assert jnp.allclose(out_feats, ref, atol=5e-3, rtol=5e-3), float(
        jnp.max(jnp.abs(out_feats - ref)))

    print("KERNEL_OK")
</pallas_src>

<mosaic_0001>
module attributes {stable_mosaic.version = 11 : i64} {
  func.func @_matmul_bias_relu_kernel(%arg0: i32, %arg1: memref<128x108xbf16, #tpu.memory_space<vmem>>, %arg2: memref<108x128xbf16, #tpu.memory_space<vmem>>, %arg3: memref<1x128xf32, #tpu.memory_space<vmem>>, %arg4: memref<128x128xf32, #tpu.memory_space<vmem>>) attributes {dimension_semantics = [#tpu.dimension_semantics<parallel>], iteration_bounds = array<i64: 2>, scalar_prefetch = 0 : i64, scratch_operands = 0 : i64, tpu.core_type = #tpu.core_type<tc>, window_params = [{transform_indices = @transform_0, window_bounds = array<i64: 128, 108>}, {pipeline_mode = #tpu.pipeline_mode<synchronous>, transform_indices = @transform_1, window_bounds = array<i64: 108, 128>}, {pipeline_mode = #tpu.pipeline_mode<synchronous>, transform_indices = @transform_2, window_bounds = array<i64: 1, 128>}, {transform_indices = @transform_3, window_bounds = array<i64: 128, 128>}]} {
    %c0 = arith.constant 0 : index
    %c0_0 = arith.constant 0 : index
    %0 = vector.load %arg1[%c0, %c0_0] : memref<128x108xbf16, #tpu.memory_space<vmem>>, vector<128x108xbf16>
    %c0_1 = arith.constant 0 : index
    %c0_2 = arith.constant 0 : index
    %1 = vector.load %arg2[%c0_1, %c0_2] : memref<108x128xbf16, #tpu.memory_space<vmem>>, vector<108x128xbf16>
    %cst = arith.constant dense<0.000000e+00> : vector<128x128xf32>
    %2 = tpu.matmul %0, %1, %cst {dimension_numbers = #tpu.dot_dimension_numbers<[1], [0], [0], [1], [0, 0, 1, 1], [], []>} : vector<128x108xbf16>, vector<108x128xbf16>, vector<128x128xf32> -> vector<128x128xf32>
    %c0_3 = arith.constant 0 : index
    %c0_4 = arith.constant 0 : index
    %3 = vector.load %arg3[%c0_3, %c0_4] : memref<1x128xf32, #tpu.memory_space<vmem>>, vector<1x128xf32>
    %4 = vector.broadcast %3 : vector<1x128xf32> to vector<128x128xf32>
    %5 = arith.addf %2, %4 : vector<128x128xf32>
    %cst_5 = arith.constant 0.000000e+00 : f32
    %6 = vector.broadcast %cst_5 : f32 to vector<128x128xf32>
    %7 = arith.maximumf %5, %6 : vector<128x128xf32>
    %c0_6 = arith.constant 0 : index
    %c0_7 = arith.constant 0 : index
    %8 = vector.load %arg4[%c0_6, %c0_7] : memref<128x128xf32, #tpu.memory_space<vmem>>, vector<128x128xf32>
    tpu.vector_store %arg4[%c0_6, %c0_7], %7 {strides = array<i32>} : memref<128x128xf32, #tpu.memory_space<vmem>>, vector<128x128xf32>,
    return
  }
  func.func @transform_0(%arg0: i32) -> (i32, i32) {
    %c0_i32 = arith.constant 0 : i32
    %c0_i32_0 = arith.constant 0 : i32
    return %arg0, %c0_i32 : i32, i32
  }
  func.func @transform_1(%arg0: i32) -> (i32, i32) {
    %c0_i32 = arith.constant 0 : i32
    %c0_i32_0 = arith.constant 0 : i32
    %c0_i32_1 = arith.constant 0 : i32
    return %c0_i32, %c0_i32_0 : i32, i32
  }
  func.func @transform_2(%arg0: i32) -> (i32, i32) {
    %c0_i32 = arith.constant 0 : i32
    %c0_i32_0 = arith.constant 0 : i32
    %c0_i32_1 = arith.constant 0 : i32
    return %c0_i32, %c0_i32_0 : i32, i32
  }
  func.func @transform_3(%arg0: i32) -> (i32, i32) {
    %c0_i32 = arith.constant 0 : i32
    %c0_i32_0 = arith.constant 0 : i32
    return %arg0, %c0_i32 : i32, i32
  }
}

module attributes {stable_mosaic.version = 11 : i64} {
  func.func @_matmul_bias_relu_res_kernel(%arg0: i32, %arg1: memref<128x216xbf16, #tpu.memory_space<vmem>>, %arg2: memref<216x128xbf16, #tpu.memory_space<vmem>>, %arg3: memref<1x128xf32, #tpu.memory_space<vmem>>, %arg4: memref<128x128xf32, #tpu.memory_space<vmem>>, %arg5: memref<128x128xf32, #tpu.memory_space<vmem>>) attributes {dimension_semantics = [#tpu.dimension_semantics<parallel>], iteration_bounds = array<i64: 2>, scalar_prefetch = 0 : i64, scratch_operands = 0 : i64, tpu.core_type = #tpu.core_type<tc>, window_params = [{transform_indices = @transform_0, window_bounds = array<i64: 128, 216>}, {pipeline_mode = #tpu.pipeline_mode<synchronous>, transform_indices = @transform_1, window_bounds = array<i64: 216, 128>}, {pipeline_mode = #tpu.pipeline_mode<synchronous>, transform_indices = @transform_2, window_bounds = array<i64: 1, 128>}, {transform_indices = @transform_3, window_bounds = array<i64: 128, 128>}, {transform_indices = @transform_4, window_bounds = array<i64: 128, 128>}]} {
    %c0 = arith.constant 0 : index
    %c0_0 = arith.constant 0 : index
    %0 = vector.load %arg1[%c0, %c0_0] : memref<128x216xbf16, #tpu.memory_space<vmem>>, vector<128x216xbf16>
    %c0_1 = arith.constant 0 : index
    %c0_2 = arith.constant 0 : index
    %1 = vector.load %arg2[%c0_1, %c0_2] : memref<216x128xbf16, #tpu.memory_space<vmem>>, vector<216x128xbf16>
    %cst = arith.constant dense<0.000000e+00> : vector<128x128xf32>
    %2 = tpu.matmul %0, %1, %cst {dimension_numbers = #tpu.dot_dimension_numbers<[1], [0], [0], [1], [0, 0, 1, 1], [], []>} : vector<128x216xbf16>, vector<216x128xbf16>, vector<128x128xf32> -> vector<128x128xf32>
    %c0_3 = arith.constant 0 : index
    %c0_4 = arith.constant 0 : index
    %3 = vector.load %arg4[%c0_3, %c0_4] : memref<128x128xf32, #tpu.memory_space<vmem>>, vector<128x128xf32>
    %c0_5 = arith.constant 0 : index
    %c0_6 = arith.constant 0 : index
    %4 = vector.load %arg3[%c0_5, %c0_6] : memref<1x128xf32, #tpu.memory_space<vmem>>, vector<1x128xf32>
    %5 = vector.broadcast %4 : vector<1x128xf32> to vector<128x128xf32>
    %6 = arith.addf %2, %5 : vector<128x128xf32>
    %cst_7 = arith.constant 0.000000e+00 : f32
    %7 = vector.broadcast %cst_7 : f32 to vector<128x128xf32>
    %8 = arith.maximumf %6, %7 : vector<128x128xf32>
    %9 = arith.addf %3, %8 : vector<128x128xf32>
    %c0_8 = arith.constant 0 : index
    %c0_9 = arith.constant 0 : index
    %10 = vector.load %arg5[%c0_8, %c0_9] : memref<128x128xf32, #tpu.memory_space<vmem>>, vector<128x128xf32>
    tpu.vector_store %arg5[%c0_8, %c0_9], %9 {strides = array<i32>} : memref<128x128xf32, #tpu.memory_space<vmem>>, vector<128x128xf32>,
    return
  }
  func.func @transform_0(%arg0: i32) -> (i32, i32) {
    %c0_i32 = arith.constant 0 : i32
    %c0_i32_0 = arith.constant 0 : i32
    return %arg0, %c0_i32 : i32, i32
  }
  func.func @transform_1(%arg0: i32) -> (i32, i32) {
    %c0_i32 = arith.constant 0 : i32
    %c0_i32_0 = arith.constant 0 : i32
    %c0_i32_1 = arith.constant 0 : i32
    return %c0_i32, %c0_i32_0 : i32, i32
  }
  func.func @transform_2(%arg0: i32) -> (i32, i32) {
    %c0_i32 = arith.constant 0 : i32
    %c0_i32_0 = arith.constant 0 : i32
    %c0_i32_1 = arith.constant 0 : i32
    return %c0_i32, %c0_i32_0 : i32, i32
  }
  func.func @transform_3(%arg0: i32) -> (i32, i32) {
    %c0_i32 = arith.constant 0 : i32
    %c0_i32_0 = arith.constant 0 : i32
    return %arg0, %c0_i32 : i32, i32
  }
  func.func @transform_4(%arg0: i32) -> (i32, i32) {
    %c0_i32 = arith.constant 0 : i32
    %c0_i32_0 = arith.constant 0 : i32
    return %arg0, %c0_i32 : i32, i32
  }
}

</mosaic_0001>

<llo_original>
// kernel: custom-call
$region0: #{custom-call}
  %s0 = inlined_call_operand.vmem [shape: u32[27,200], index: 0, kind: output, shape index: {}]

// kernel: squeeze.6
$region0: #{squeeze.6}
  %s0 = inlined_call_operand.vmem [shape: s32[5400], index: 0, kind: input, shape index: {}]
  %s1 = inlined_call_operand.vmem [shape: s32[27,200], index: 1, kind: output, shape index: {}]
  %s2 = scalar_lea.vmem %s0, 1
  %s3 = smov 3
  %v4 = vld [vmem:[%s2] ss:$25 sm:%s3]
  %vm5 = vcmask 588800
  %s6 = scalar_lea.vmem %s1, 8
  %7 = vst.msk [vmem:[%s6] sm:$0x1] %vm5, %v4
  %s8 = scalar_lea.vmem %s1, 39
  %9 = vst.msk [vmem:[%s8] sm:$0x2] %vm5, %v4
  %s10 = smov 3
  %v11 = vld [vmem:[%s0] ss:$25 sm:%s10]
  %12 = vst [vmem:[%s1] sm:$0x1] %v11
  %s13 = scalar_lea.vmem %s1, 31
  %14 = vst [vmem:[%s13] sm:$0x2] %v11
  %s15 = scalar_lea.vmem %s0, 15
  %s16 = smov 3
  %v17 = vld [vmem:[%s15] ss:$25 sm:%s16]
  %s18 = scalar_lea.vmem %s0, 15
  %s19 = smov 3
  %v20 = vld [vmem:[%s18] ss:$25 sm:%s19]
  %vm21 = vcmask 64512
  %v22 = vsel %vm21, %v20, %v17
  %23 = vrot.lane.b32.xlu0 %v22, 120
  %v24 = vpop.permute.xlu0 %23
  %vm25 = vcmask 588800
  %s26 = scalar_lea.vmem %s1, 25
  %27 = vst.msk [vmem:[%s26] sm:$0x1] %vm25, %v24
  %s28 = scalar_lea.vmem %s1, 56
  %29 = vst.msk [vmem:[%s28] sm:$0x2] %vm25, %v24
  %vm30 = vcmask 1048512
  %s31 = scalar_lea.vmem %s1, 17
  %32 = vst.msk [vmem:[%s31] sm:$0x1] %vm30, %v24
  %s33 = scalar_lea.vmem %s1, 48
  %34 = vst.msk [vmem:[%s33] sm:$0x2] %vm30, %v24
  %s35 = scalar_lea.vmem %s0, 14
  %s36 = smov 3
  %v37 = vld [vmem:[%s35] ss:$25 sm:%s36]
  %38 = vrot.lane.b32.xlu0 %v37, 120
  %v39 = vpop.permute.xlu0 %38
  %vm40 = vcmask 982016
  %s41 = scalar_lea.vmem %s1, 17
  %42 = vst.msk [vmem:[%s41] sm:$0x1] %vm40, %v39
  %s43 = scalar_lea.vmem %s1, 48
  %44 = vst.msk [vmem:[%s43] sm:$0x2] %vm40, %v39
  %s45 = scalar_lea.vmem %s0, 4
  %s46 = smov 3
  %v47 = vld [vmem:[%s45] ss:$25 sm:%s46]
  %s48 = scalar_lea.vmem %s0, 4
  %s49 = smov 3
  %v50 = vld [vmem:[%s48] ss:$25 sm:%s49]
  %vm51 = vcmask 130048
  %v52 = vsel %vm51, %v50, %v47
  %53 = vrot.lane.b32.xlu0 %v52, 112
  %v54 = vpop.permute.xlu0 %53
  %vm55 = vcmask 588800
  %s56 = scalar_lea.vmem %s1, 10
  %57 = vst.msk [vmem:[%s56] sm:$0x1] %vm55, %v54
  %s58 = scalar_lea.vmem %s1, 41
  %59 = vst.msk [vmem:[%s58] sm:$0x2] %vm55, %v54
  %vm60 = vcmask 1048448
  %s61 = scalar_lea.vmem %s1, 2
  %62 = vst.msk [vmem:[%s61] sm:$0x1] %vm60, %v54
  %s63 = scalar_lea.vmem %s1, 33
  %64 = vst.msk [vmem:[%s63] sm:$0x2] %vm60, %v54
  %s65 = scalar_lea.vmem %s0, 3
  %s66 = smov 3
  %v67 = vld [vmem:[%s65] ss:$25 sm:%s66]
  %68 = vrot.lane.b32.xlu0 %v67, 112
  %v69 = vpop.permute.xlu0 %68
  %vm70 = vcmask 916480
  %s71 = scalar_lea.vmem %s1, 2
  %72 = vst.msk [vmem:[%s71] sm:$0x1] %vm70, %v69
  %s73 = scalar_lea.vmem %s1, 33
  %74 = vst.msk [vmem:[%s73] sm:$0x2] %vm70, %v69
  %s75 = scalar_lea.vmem %s0, 18
  %v76 = vld [vmem:[%s75] sm:$0x1]
  %s77 = scalar_lea.vmem %s0, 18
  %v78 = vld [vmem:[%s77] sm:$0x1]
  %vm79 = vcmask 195584
  %v80 = vsel %vm79, %v78, %v76
  %81 = vrot.lane.b32.xlu0 %v80, 104
  %v82 = vpop.permute.xlu0 %81
  %vm83 = vcmask 588800
  %s84 = scalar_lea.vmem %s1, 27
  %85 = vst.msk [vmem:[%s84] sm:$0x1] %vm83, %v82
  %vm86 = vcmask 1048384
  %s87 = scalar_lea.vmem %s1, 19
  %88 = vst.msk [vmem:[%s87] sm:$0x1] %vm86, %v82
  %s89 = scalar_lea.vmem %s0, 17
  %v90 = vld [vmem:[%s89] sm:$0x1]
  %91 = vrot.lane.b32.xlu0 %v90, 104
  %v92 = vpop.permute.xlu0 %91
  %vm93 = vcmask 850944
  %s94 = scalar_lea.vmem %s1, 19
  %95 = vst.msk [vmem:[%s94] sm:$0x1] %vm93, %v92
  %s96 = scalar_lea.vmem %s0, 7
  %s97 = smov 3
  %v98 = vld [vmem:[%s96] ss:$25 sm:%s97]
  %s99 = scalar_lea.vmem %s0, 7
  %s100 = smov 3
  %v101 = vld [vmem:[%s99] ss:$25 sm:%s100]
  %vm102 = vcmask 261120
  %v103 = vsel %vm102, %v101, %v98
  %104 = vrot.lane.b32.xlu0 %v103, 96
  %v105 = vpop.permute.xlu0 %104
  %vm106 = vcmask 588800
  %s107 = scalar_lea.vmem %s1, 12
  %108 = vst.msk [vmem:[%s107] sm:$0x1] %vm106, %v105
  %s109 = scalar_lea.vmem %s1, 43
  %110 = vst.msk [vmem:[%s109] sm:$0x2] %vm106, %v105
  %vm111 = vcmask 1048320
  %s112 = scalar_lea.vmem %s1, 4
  %113 = vst.msk [vmem:[%s112] sm:$0x1] %vm111, %v105
  %s114 = scalar_lea.vmem %s1, 35
  %115 = vst.msk [vmem:[%s114] sm:$0x2] %vm111, %v105
  %s116 = scalar_lea.vmem %s0, 6
  %s117 = smov 3
  %v118 = vld [vmem:[%s116] ss:$25 sm:%s117]
  %119 = vrot.lane.b32.xlu0 %v118, 96
  %v120 = vpop.permute.xlu0 %119
  %vm121 = vcmask 785408
  %s122 = scalar_lea.vmem %s1, 4
  %123 = vst.msk [vmem:[%s122] sm:$0x1] %vm121, %v120
  %s124 = scalar_lea.vmem %s1, 35
  %125 = vst.msk [vmem:[%s124] sm:$0x2] %vm121, %v120
  %s126 = scalar_lea.vmem %s0, 21
  %v127 = vld [vmem:[%s126] sm:$0x1]
  %s128 = scalar_lea.vmem %s0, 21
  %v129 = vld [vmem:[%s128] sm:$0x1]
  %vm130 = vcmask 326656
  %v131 = vsel %vm130, %v129, %v127
  %132 = vrot.lane.b32.xlu0 %v131, 88
  %v133 = vpop.permute.xlu0 %132
  %vm134 = vcmask 588800
  %s135 = scalar_lea.vmem %s1, 29
  %136 = vst.msk [vmem:[%s135] sm:$0x1] %vm134, %v133
  %vm137 = vcmask 1048256
  %s138 = scalar_lea.vmem %s1, 21
  %139 = vst.msk [vmem:[%s138] sm:$0x1] %vm137, %v133
  %s140 = scalar_lea.vmem %s0, 20
  %v141 = vld [vmem:[%s140] sm:$0x1]
  %142 = vrot.lane.b32.xlu0 %v141, 88
  %v143 = vpop.permute.xlu0 %142
  %vm144 = vcmask 719872
  %s145 = scalar_lea.vmem %s1, 21
  %146 = vst.msk [vmem:[%s145] sm:$0x1] %vm144, %v143
  %s147 = scalar_lea.vmem %s0, 10
  %s148 = smov 3
  %v149 = vld [vmem:[%s147] ss:$25 sm:%s148]
  %s150 = scalar_lea.vmem %s0, 10
  %s151 = smov 3
  %v152 = vld [vmem:[%s150] ss:$25 sm:%s151]
  %vm153 = vcmask 392192
  %v154 = vsel %vm153, %v152, %v149
  %155 = vrot.lane.b32.xlu0 %v154, 80
  %v156 = vpop.permute.xlu0 %155
  %vm157 = vcmask 588800
  %s158 = scalar_lea.vmem %s1, 14
  %159 = vst.msk [vmem:[%s158] sm:$0x1] %vm157, %v156
  %s160 = scalar_lea.vmem %s1, 45
  %161 = vst.msk [vmem:[%s160] sm:$0x2] %vm157, %v156
  %vm162 = vcmask 1048192
  %s163 = scalar_lea.vmem %s1, 6
  %164 = vst.msk [vmem:[%s163] sm:$0x1] %vm162, %v156
  %s165 = scalar_lea.vmem %s1, 37
  %166 = vst.msk [vmem:[%s165] sm:$0x2] %vm162, %v156
  %s167 = scalar_lea.vmem %s0, 9
  %s168 = smov 3
  %v169 = vld [vmem:[%s167] ss:$25 sm:%s168]
  %170 = vrot.lane.b32.xlu0 %v169, 80
  %v171 = vpop.permute.xlu0 %170
  %vm172 = vcmask 654336
  %s173 = scalar_lea.vmem %s1, 6
  %174 = vst.msk [vmem:[%s173] sm:$0x1] %vm172, %v171
  %s175 = scalar_lea.vmem %s1, 37
  %176 = vst.msk [vmem:[%s175] sm:$0x2] %vm172, %v171
  %s177 = scalar_lea.vmem %s0, 23
  %v178 = vld [vmem:[%s177] sm:$0x3]
  %s179 = scalar_lea.vmem %s0, 24
  %v180 = vld [vmem:[%s179] sm:$0x1]
  %vm181 = vcmask 457728
  %v182 = vsel %vm181, %v180, %v178
  %183 = vrot.lane.b32.xlu0 %v182, 72
  %v184 = vpop.permute.xlu0 %183
  %vm185 = vcmask 588800
  %s186 = scalar_lea.vmem %s1, 23
  %187 = vst.msk [vmem:[%s186] ss:$8 sm:$0x3] %vm185, %v184
  %vm188 = vcmask 1048128
  %s189 = scalar_lea.vmem %s1, 23
  %190 = vst.msk [vmem:[%s189] sm:$0x1] %vm188, %v184
  %s191 = scalar_lea.vmem %s0, 12
  %v192 = vld [vmem:[%s191] sm:$0x3]
  %s193 = scalar_lea.vmem %s0, 35
  %v194 = vld [vmem:[%s193] sm:$0xc]
  %vm195 = vcmask 1043458
  %v196 = vsel %vm195, %v194, %v192
  %s197 = scalar_lea.vmem %s0, 14
  %s198 = smov 3
  %v199 = vld [vmem:[%s197] ss:$25 sm:%s198]
  %vm200 = vcmask 523264
  %v201 = vsel %vm200, %v199, %v196
  %202 = vrot.lane.b32.xlu0 %v201, 64
  %v203 = vpop.permute.xlu0 %202
  %vm204 = vcmask 523264
  %s205 = scalar_lea.vmem %s1, 16
  %206 = vst.msk [vmem:[%s205] ss:$8 sm:$0x3] %vm204, %v203
  %s207 = scalar_lea.vmem %s1, 32
  %208 = vst.msk [vmem:[%s207] ss:$8 sm:$0xc] %vm204, %v203
  %vm209 = vcmask 589312
  %s210 = scalar_lea.vmem %s1, 24
  %211 = vst.msk [vmem:[%s210] sm:$0x1] %vm209, %v203
  %s212 = scalar_lea.vmem %s1, 55
  %213 = vst.msk [vmem:[%s212] sm:$0x2] %vm209, %v203
  %s214 = scalar_lea.vmem %s0, 13
  %s215 = smov 3
  %v216 = vld [vmem:[%s214] ss:$25 sm:%s215]
  %217 = vrot.lane.b32.xlu0 %v216, 64
  %v218 = vpop.permute.xlu0 %217
  %vm219 = vcmask 1048064
  %s220 = scalar_lea.vmem %s1, 16
  %221 = vst.msk [vmem:[%s220] sm:$0x1] %vm219, %v218
  %s222 = scalar_lea.vmem %s1, 47
  %223 = vst.msk [vmem:[%s222] sm:$0x2] %vm219, %v218
  %s224 = scalar_lea.vmem %s0, 1
  %v225 = vld [vmem:[%s224] sm:$0x3]
  %s226 = scalar_lea.vmem %s0, 24
  %v227 = vld [vmem:[%s226] sm:$0xc]
  %vm228 = vcmask 1043458
  %v229 = vsel %vm228, %v227, %v225
  %s230 = scalar_lea.vmem %s0, 3
  %s231 = smov 3
  %v232 = vld [vmem:[%s230] ss:$25 sm:%s231]
  %vm233 = vcmask 588800
  %v234 = vsel %vm233, %v232, %v229
  %235 = vrot.lane.b32.xlu0 %v234, 56
  %v236 = vpop.permute.xlu0 %235
  %vm237 = vcmask 457728
  %s238 = scalar_lea.vmem %s1, 1
  %239 = vst.msk [vmem:[%s238] ss:$8 sm:$0x3] %vm237, %v236
  %s240 = scalar_lea.vmem %s1, 17
  %241 = vst.msk [vmem:[%s240] ss:$8 sm:$0xc] %vm237, %v236
  %vm242 = vcmask 589248
  %s243 = scalar_lea.vmem %s1, 9
  %244 = vst.msk [vmem:[%s243] sm:$0x1] %vm242, %v236
  %s245 = scalar_lea.vmem %s1, 40
  %246 = vst.msk [vmem:[%s245] sm:$0x2] %vm242, %v236
  %s247 = scalar_lea.vmem %s0, 2
  %s248 = smov 3
  %v249 = vld [vmem:[%s247] ss:$25 sm:%s248]
  %250 = vrot.lane.b32.xlu0 %v249, 56
  %v251 = vpop.permute.xlu0 %250
  %vm252 = vcmask 1048000
  %s253 = scalar_lea.vmem %s1, 1
  %254 = vst.msk [vmem:[%s253] sm:$0x1] %vm252, %v251
  %s255 = scalar_lea.vmem %s1, 32
  %256 = vst.msk [vmem:[%s255] sm:$0x2] %vm252, %v251
  %s257 = scalar_lea.vmem %s0, 15
  %v258 = vld [vmem:[%s257] sm:$0x3]
  %s259 = scalar_lea.vmem %s0, 38
  %v260 = vld [vmem:[%s259] sm:$0xc]
  %vm261 = vcmask 1043458
  %v262 = vsel %vm261, %v260, %v258
  %s263 = scalar_lea.vmem %s0, 17
  %s264 = smov 3
  %v265 = vld [vmem:[%s263] ss:$25 sm:%s264]
  %vm266 = vcmask 654336
  %v267 = vsel %vm266, %v265, %v262
  %268 = vrot.lane.b32.xlu0 %v267, 48
  %v269 = vpop.permute.xlu0 %268
  %vm270 = vcmask 392192
  %s271 = scalar_lea.vmem %s1, 18
  %272 = vst.msk [vmem:[%s271] ss:$8 sm:$0x3] %vm270, %v269
  %s273 = scalar_lea.vmem %s1, 34
  %274 = vst.msk [vmem:[%s273] ss:$8 sm:$0xc] %vm270, %v269
  %vm275 = vcmask 589184
  %s276 = scalar_lea.vmem %s1, 26
  %277 = vst.msk [vmem:[%s276] sm:$0x1] %vm275, %v269
  %s278 = scalar_lea.vmem %s1, 57
  %279 = vst.msk [vmem:[%s278] sm:$0x2] %vm275, %v269
  %s280 = scalar_lea.vmem %s0, 16
  %s281 = smov 3
  %v282 = vld [vmem:[%s280] ss:$25 sm:%s281]
  %283 = vrot.lane.b32.xlu0 %v282, 48
  %v284 = vpop.permute.xlu0 %283
  %vm285 = vcmask 1047936
  %s286 = scalar_lea.vmem %s1, 18
  %287 = vst.msk [vmem:[%s286] sm:$0x1] %vm285, %v284
  %s288 = scalar_lea.vmem %s1, 49
  %289 = vst.msk [vmem:[%s288] sm:$0x2] %vm285, %v284
  %s290 = scalar_lea.vmem %s0, 4
  %v291 = vld [vmem:[%s290] sm:$0x3]
  %s292 = scalar_lea.vmem %s0, 27
  %v293 = vld [vmem:[%s292] sm:$0xc]
  %vm294 = vcmask 1043458
  %v295 = vsel %vm294, %v293, %v291
  %s296 = scalar_lea.vmem %s0, 6
  %s297 = smov 3
  %v298 = vld [vmem:[%s296] ss:$25 sm:%s297]
  %vm299 = vcmask 719872
  %v300 = vsel %vm299, %v298, %v295
  %301 = vrot.lane.b32.xlu0 %v300, 40
  %v302 = vpop.permute.xlu0 %301
  %vm303 = vcmask 326656
  %s304 = scalar_lea.vmem %s1, 3
  %305 = vst.msk [vmem:[%s304] ss:$8 sm:$0x3] %vm303, %v302
  %s306 = scalar_lea.vmem %s1, 19
  %307 = vst.msk [vmem:[%s306] ss:$8 sm:$0xc] %vm303, %v302
  %vm308 = vcmask 589120
  %s309 = scalar_lea.vmem %s1, 11
  %310 = vst.msk [vmem:[%s309] sm:$0x1] %vm308, %v302
  %s311 = scalar_lea.vmem %s1, 42
  %312 = vst.msk [vmem:[%s311] sm:$0x2] %vm308, %v302
  %s313 = scalar_lea.vmem %s0, 5
  %s314 = smov 3
  %v315 = vld [vmem:[%s313] ss:$25 sm:%s314]
  %316 = vrot.lane.b32.xlu0 %v315, 40
  %v317 = vpop.permute.xlu0 %316
  %vm318 = vcmask 1047872
  %s319 = scalar_lea.vmem %s1, 3
  %320 = vst.msk [vmem:[%s319] sm:$0x1] %vm318, %v317
  %s321 = scalar_lea.vmem %s1, 34
  %322 = vst.msk [vmem:[%s321] sm:$0x2] %vm318, %v317
  %s323 = scalar_lea.vmem %s0, 18
  %v324 = vld [vmem:[%s323] sm:$0x3]
  %s325 = scalar_lea.vmem %s0, 20
  %v326 = vld [vmem:[%s325] sm:$0x1]
  %vm327 = vcmask 785408
  %v328 = vsel %vm327, %v326, %v324
  %329 = vrot.lane.b32.xlu0 %v328, 32
  %v330 = vpop.permute.xlu0 %329
  %vm331 = vcmask 261120
  %s332 = scalar_lea.vmem %s1, 20
  %333 = vst.msk [vmem:[%s332] ss:$8 sm:$0x3] %vm331, %v330
  %vm334 = vcmask 589056
  %s335 = scalar_lea.vmem %s1, 28
  %336 = vst.msk [vmem:[%s335] sm:$0x1] %vm334, %v330
  %s337 = scalar_lea.vmem %s0, 19
  %v338 = vld [vmem:[%s337] sm:$0x1]
  %339 = vrot.lane.b32.xlu0 %v338, 32
  %v340 = vpop.permute.xlu0 %339
  %vm341 = vcmask 1047808
  %s342 = scalar_lea.vmem %s1, 20
  %343 = vst.msk [vmem:[%s342] sm:$0x1] %vm341, %v340
  %s344 = scalar_lea.vmem %s0, 7
  %v345 = vld [vmem:[%s344] sm:$0x3]
  %s346 = scalar_lea.vmem %s0, 30
  %v347 = vld [vmem:[%s346] sm:$0xc]
  %vm348 = vcmask 1043458
  %v349 = vsel %vm348, %v347, %v345
  %s350 = scalar_lea.vmem %s0, 9
  %s351 = smov 3
  %v352 = vld [vmem:[%s350] ss:$25 sm:%s351]
  %vm353 = vcmask 850944
  %v354 = vsel %vm353, %v352, %v349
  %355 = vrot.lane.b32.xlu0 %v354, 24
  %v356 = vpop.permute.xlu0 %355
  %vm357 = vcmask 195584
  %s358 = scalar_lea.vmem %s1, 5
  %359 = vst.msk [vmem:[%s358] ss:$8 sm:$0x3] %vm357, %v356
  %s360 = scalar_lea.vmem %s1, 21
  %361 = vst.msk [vmem:[%s360] ss:$8 sm:$0xc] %vm357, %v356
  %vm362 = vcmask 588992
  %s363 = scalar_lea.vmem %s1, 13
  %364 = vst.msk [vmem:[%s363] sm:$0x1] %vm362, %v356
  %s365 = scalar_lea.vmem %s1, 44
  %366 = vst.msk [vmem:[%s365] sm:$0x2] %vm362, %v356
  %s367 = scalar_lea.vmem %s0, 8
  %s368 = smov 3
  %v369 = vld [vmem:[%s367] ss:$25 sm:%s368]
  %370 = vrot.lane.b32.xlu0 %v369, 24
  %v371 = vpop.permute.xlu0 %370
  %vm372 = vcmask 1047744
  %s373 = scalar_lea.vmem %s1, 5
  %374 = vst.msk [vmem:[%s373] sm:$0x1] %vm372, %v371
  %s375 = scalar_lea.vmem %s1, 36
  %376 = vst.msk [vmem:[%s375] sm:$0x2] %vm372, %v371
  %s377 = scalar_lea.vmem %s0, 21
  %v378 = vld [vmem:[%s377] sm:$0x3]
  %s379 = scalar_lea.vmem %s0, 23
  %v380 = vld [vmem:[%s379] sm:$0x1]
  %vm381 = vcmask 916480
  %v382 = vsel %vm381, %v380, %v378
  %383 = vrot.lane.b32.xlu0 %v382, 16
  %v384 = vpop.permute.xlu0 %383
  %vm385 = vcmask 130048
  %s386 = scalar_lea.vmem %s1, 22
  %387 = vst.msk [vmem:[%s386] ss:$8 sm:$0x3] %vm385, %v384
  %vm388 = vcmask 588928
  %s389 = scalar_lea.vmem %s1, 30
  %390 = vst.msk [vmem:[%s389] sm:$0x1] %vm388, %v384
  %s391 = scalar_lea.vmem %s0, 22
  %v392 = vld [vmem:[%s391] sm:$0x1]
  %393 = vrot.lane.b32.xlu0 %v392, 16
  %v394 = vpop.permute.xlu0 %393
  %vm395 = vcmask 1047680
  %s396 = scalar_lea.vmem %s1, 22
  %397 = vst.msk [vmem:[%s396] sm:$0x1] %vm395, %v394
  %s398 = scalar_lea.vmem %s0, 10
  %v399 = vld [vmem:[%s398] sm:$0x3]
  %s400 = scalar_lea.vmem %s0, 33
  %v401 = vld [vmem:[%s400] sm:$0xc]
  %vm402 = vcmask 1043458
  %v403 = vsel %vm402, %v401, %v399
  %s404 = scalar_lea.vmem %s0, 12
  %s405 = smov 3
  %v406 = vld [vmem:[%s404] ss:$25 sm:%s405]
  %vm407 = vcmask 982016
  %v408 = vsel %vm407, %v406, %v403
  %409 = vrot.lane.b32.xlu0 %v408, 8
  %v410 = vpop.permute.xlu0 %409
  %vm411 = vcmask 64512
  %s412 = scalar_lea.vmem %s1, 7
  %413 = vst.msk [vmem:[%s412] ss:$8 sm:$0x3] %vm411, %v410
  %s414 = scalar_lea.vmem %s1, 23
  %415 = vst.msk [vmem:[%s414] ss:$8 sm:$0xc] %vm411, %v410
  %vm416 = vcmask 588864
  %s417 = scalar_lea.vmem %s1, 15
  %418 = vst.msk [vmem:[%s417] sm:$0x1] %vm416, %v410
  %s419 = scalar_lea.vmem %s1, 46
  %420 = vst.msk [vmem:[%s419] sm:$0x2] %vm416, %v410
  %s421 = scalar_lea.vmem %s0, 11
  %s422 = smov 3
  %v423 = vld [vmem:[%s421] ss:$25 sm:%s422]
  %424 = vrot.lane.b32.xlu0 %v423, 8
  %v425 = vpop.permute.xlu0 %424
  %vm426 = vcmask 1047616
  %s427 = scalar_lea.vmem %s1, 7
  %428 = vst.msk [vmem:[%s427] sm:$0x1] %vm426, %v425
  %s429 = scalar_lea.vmem %s1, 38
  %430 = vst.msk [vmem:[%s429] sm:$0x2] %vm426, %v425

// kernel: resblock_forward.2
$region0: #{resblock_forward.2}
  #allocation0 [shape = 'u32[]', space=smem, size = 0x4, offset = 0x4, fixed_abs, tag = 'smem constant byte address 0x4 - core index']
  #allocation1 [shape = 'u32[144,128]{1,0:T(1,128)}', space=vmem, size = 0x12000, scoped, tag = 'internal scratch']
  %s0 = inlined_call_operand.vmem [shape: bf16[256,108], index: 0, kind: input, shape index: {}]
  %s1 = inlined_call_operand.vmem [shape: bf16[108,128], index: 1, kind: input, shape index: {}]
  %s2 = inlined_call_operand.vmem [shape: f32[1,128], index: 2, kind: input, shape index: {}]
  %s3 = inlined_call_operand.vmem [shape: f32[256,128], index: 3, kind: output, shape index: {}]
  %s4 = sld [smem:[#allocation0]]
  $region45: #{resblock_forward.2} parent=0
    _
  %s6 = ssub.s32 1, %s4
  %s7 = scalar_select 0, %s6, %s4
  loop: start=0, step=1, limit=4
  $region2: #{resblock_forward.2} parent=0 // loop_pre_header
    _
  $region3: #{resblock_forward.2} parent=0 // loop_header
    %s9 = sphi 0, %s13
    %p10 = scmp.ge.s32.totalorder %s9, 4
    %s19 = sphi 0, %s21
    %s22 = sphi 0, %s19
    %s23 = sphi 0, %s22
    %s39 = sphi 0, %s23
    %s43 = sphi 0, %s43
    %s45 = sphi 0, %s43
    %s46 = sphi 0, %s45
    %s60 = sphi 0, %s46
    %s64 = sphi 0, %s64
    %s66 = sphi 0, %s64
    %s67 = sphi 0, %s66
    %s81 = sphi 0, %s67
    %s87 = sphi 0, %s89
    %s90 = sphi 0, %s87
    %s91 = sphi 0, %s90
    %s107 = sphi 0, %s91
  $region4: #{resblock_forward.2} parent=0 // loop_header_branch
    %12 = sbr.rel (%p10) target = $region8
  $region5: #{resblock_forward.2} parent=0 // loop_body
    %s14 = ssub.s32 %s9, 1
    %s15 = ssub.s32 %s9, 2
    %s16 = sadd.s32 %s9, 1
    %s17 = ssub.s32 %s9, %s16
    %p18 = scmp.eq.s32.totalorder %s17, 0
    %s20 = sadd.s32 %s19, 1
    %s21 = scalar_select %p18, %s19, %s20
    %p24 = pneg %p18
    %p25 = scmp.eq.s32.totalorder %s9, 1
    %p26 = por %p24, %p25
    %p27 = scmp.ne.s32.totalorder %s19, %s22
    %p28 = scmp.eq.s32.totalorder %s9, 0
    %p29 = por %p27, %p28
    %p30 = scmp.ne.s32.totalorder %s19, %s22
    %p31 = scmp.eq.s32.totalorder %s14, 1
    %p32 = por %p30, %p31
    %p33 = scmp.ne.s32.totalorder %s22, %s23
    %p34 = scmp.eq.s32.totalorder %s14, 0
    %p35 = por %p33, %p34
    %p36 = scmp.ne.s32.totalorder %s22, %s23
    %p37 = scmp.eq.s32.totalorder %s15, 1
    %p38 = por %p36, %p37
    %p40 = scmp.ne.s32.totalorder %s23, %s39
    %p41 = scmp.eq.s32.totalorder %s15, 0
    %p42 = por %p40, %p41
    %s44 = sadd.s32 %s43, 1
    %p47 = scmp.eq.s32.totalorder %s9, 1
    %p48 = scmp.ne.s32.totalorder %s43, %s45
    %p49 = scmp.eq.s32.totalorder %s9, 0
    %p50 = por %p48, %p49
    %p51 = scmp.ne.s32.totalorder %s43, %s45
    %p52 = scmp.eq.s32.totalorder %s14, 1
    %p53 = por %p51, %p52
    %p54 = scmp.ne.s32.totalorder %s45, %s46
    %p55 = scmp.eq.s32.totalorder %s14, 0
    %p56 = por %p54, %p55
    %p57 = scmp.ne.s32.totalorder %s45, %s46
    %p58 = scmp.eq.s32.totalorder %s15, 1
    %p59 = por %p57, %p58
    %p61 = scmp.ne.s32.totalorder %s46, %s60
    %p62 = scmp.eq.s32.totalorder %s15, 0
    %p63 = por %p61, %p62
    %s65 = sadd.s32 %s64, 1
    %p68 = scmp.eq.s32.totalorder %s9, 1
    %p69 = scmp.ne.s32.totalorder %s64, %s66
    %p70 = scmp.eq.s32.totalorder %s9, 0
    %p71 = por %p69, %p70
    %p72 = scmp.ne.s32.totalorder %s64, %s66
    %p73 = scmp.eq.s32.totalorder %s14, 1
    %p74 = por %p72, %p73
    %p75 = scmp.ne.s32.totalorder %s66, %s67
    %p76 = scmp.eq.s32.totalorder %s14, 0
    %p77 = por %p75, %p76
    %p78 = scmp.ne.s32.totalorder %s66, %s67
    %p79 = scmp.eq.s32.totalorder %s15, 1
    %p80 = por %p78, %p79
    %p82 = scmp.ne.s32.totalorder %s67, %s81
    %p83 = scmp.eq.s32.totalorder %s15, 0
    %p84 = por %p82, %p83
    %s85 = ssub.s32 %s9, %s16
    %p86 = scmp.eq.s32.totalorder %s85, 0
    %s88 = sadd.s32 %s87, 1
    %s89 = scalar_select %p86, %s87, %s88
    %p92 = pneg %p86
    %p93 = scmp.eq.s32.totalorder %s9, 1
    %p94 = por %p92, %p93
    %p95 = scmp.ne.s32.totalorder %s87, %s90
    %p96 = scmp.eq.s32.totalorder %s9, 0
    %p97 = por %p95, %p96
    %p98 = scmp.ne.s32.totalorder %s87, %s90
    %p99 = scmp.eq.s32.totalorder %s14, 1
    %p100 = por %p98, %p99
    %p101 = scmp.ne.s32.totalorder %s90, %s91
    %p102 = scmp.eq.s32.totalorder %s14, 0
    %p103 = por %p101, %p102
    %p104 = scmp.ne.s32.totalorder %s90, %s91
    %p105 = scmp.eq.s32.totalorder %s15, 1
    %p106 = por %p104, %p105
    %p108 = scmp.ne.s32.totalorder %s91, %s107
    %p109 = scmp.eq.s32.totalorder %s15, 0
    %p110 = por %p108, %p109
    %p111 = scmp.le.s32.totalorder 1, %s9
    %p112 = scmp.lt.s32.totalorder %s9, 3
    %p113 = pnand %p111, %p112
    %p114 = pneg %p113
    // Predicated region
    $region9: #{resblock_forward.2} parent=5 // pred_check
      _
    $region10: #{resblock_forward.2} parent=5 // pred_check_branch
      %116 = sbr.rel (%p113) target = $region12
    $region11: #{resblock_forward.2} parent=5 // pred_region
      %s117 = ssub.s32 %s9, 1
      // Predicated region
      $region13: #{resblock_forward.2} parent=11 // pred_check
        %p118 = pneg %p56
      $region14: #{resblock_forward.2} parent=11 // pred_check_branch
        %120 = sbr.rel (%p118) target = $region16
      $region15: #{resblock_forward.2} parent=11 // pred_region
        _
      $region16: #{resblock_forward.2} parent=11 // pred_fallthru
        _
      // Predicated region
      $region17: #{resblock_forward.2} parent=11 // pred_check
        %p121 = pneg %p77
      $region18: #{resblock_forward.2} parent=11 // pred_check_branch
        %123 = sbr.rel (%p121) target = $region20
      $region19: #{resblock_forward.2} parent=11 // pred_region
        _
      $region20: #{resblock_forward.2} parent=11 // pred_fallthru
        _
    $region12: #{resblock_forward.2} parent=5 // pred_fallthru
      _
    %p124 = scmp.lt.s32.totalorder %s9, 2
    // Predicated region
    $region21: #{resblock_forward.2} parent=5 // pred_check
      %p125 = pneg %p124
    $region22: #{resblock_forward.2} parent=5 // pred_check_branch
      %127 = sbr.rel (%p125) target = $region24
    $region23: #{resblock_forward.2} parent=5 // pred_region
      // Predicated region
      $region25: #{resblock_forward.2} parent=23 // pred_check
        %p128 = pneg %p29
      $region26: #{resblock_forward.2} parent=23 // pred_check_branch
        %130 = sbr.rel (%p128) target = $region28
      $region27: #{resblock_forward.2} parent=23 // pred_region
        %s131 = smul.u32 16, %s9
        %p132 = scmp.lt.s32.totalorder %s131, 31
        %s133 = scalar_select %p132, %s131, 31
        %s134 = smul.addr %s133, 4
        %s135 = scalar_lea.vmem %s0, %s134
        %s136 = smul.u32 16, %s9
      $region28: #{resblock_forward.2} parent=23 // pred_fallthru
        _
    $region24: #{resblock_forward.2} parent=5 // pred_fallthru
      _
    %p137 = scmp.le.s32.totalorder 1, %s9
    %p138 = scmp.lt.s32.totalorder %s9, 3
    %p139 = pnand %p137, %p138
    %p140 = pneg %p139
    // Predicated region
    $region29: #{resblock_forward.2} parent=5 // pred_check
      _
    $region30: #{resblock_forward.2} parent=5 // pred_check_branch
      %142 = sbr.rel (%p139) target = $region32
    $region31: #{resblock_forward.2} parent=5 // pred_region
      %s143 = ssub.s32 %s9, 1
      %s144 = smul.u32 16, %s14
      %p145 = scmp.lt.s32.totalorder %s144, 31
      %s146 = scalar_select %p145, %s144, 31
      %s147 = smul.addr %s146, 4
      %s148 = scalar_lea.vmem %s0, %s147
      %p149 = pneg %p35
      %p150 = pneg %p32
      %p151 = pneg %p56
      %p152 = pneg %p53
      %p153 = pneg %p77
      %p154 = pneg %p74
      %p155 = pneg %p103
      %p156 = pneg %p100
      %s157 = smul.u32 16, %s14
      %p158 = scmp.lt.s32.totalorder %s157, 31
      %s159 = scalar_select %p158, %s157, 31
      %s160 = smul.addr %s159, 8
      %s161 = scalar_lea.vmem %s3, %s160
      %s162 = smul.u32 16, %s14
      %p163 = scmp.lt.s32.totalorder %s162, 31
      %s164 = scalar_select %p163, %s162, 31
      %s165 = smul.addr %s164, 4
      %s166 = scalar_lea.vmem %s0, %s165
      %s167 = smul.u32 16, %s14
      %s168 = smul.u32 16, %s14
      %p169 = scmp.lt.s32.totalorder %s168, 31
      %s170 = scalar_select %p169, %s168, 31
      %s171 = smul.addr %s170, 8
      %s172 = scalar_lea.vmem %s3, %s171
      %s173 = smul.u32 16, %s14
      %v175 = vld [vmem:[%s166] sm:$0xf]
      %v176 = vld [vmem:[%s166 + $0x4] sm:$0xf]
      %v177 = vld [vmem:[%s166 + $0x8] sm:$0xf]
      %v178 = vld [vmem:[%s166 + $0xc] sm:$0xf]
      %v179 = vld [vmem:[%s166 + $0x10] sm:$0xf]
      %v180 = vld [vmem:[%s166 + $0x14] sm:$0xf]
      %v181 = vld [vmem:[%s166 + $0x18] sm:$0xf]
      %v182 = vld [vmem:[%s166 + $0x1c] sm:$0xf]
      %v183 = vld [vmem:[%s166 + $0x20] sm:$0xf]
      %v184 = vld [vmem:[%s166 + $0x24] sm:$0xf]
      %v185 = vld [vmem:[%s166 + $0x28] sm:$0xf]
      %v186 = vld [vmem:[%s166 + $0x2c] sm:$0xf]
      %v187 = vld [vmem:[%s166 + $0x30] sm:$0xf]
      %v188 = vld [vmem:[%s166 + $0x34] sm:$0xf]
      %v189 = vld [vmem:[%s166 + $0x38] sm:$0xf]
      %v190 = vld [vmem:[%s166 + $0x3c] sm:$0xf]
      %v191 = vld [vmem:[%s1] sm:$0xf]
      %v192 = vld [vmem:[%s1 + $0x4] sm:$0xf]
      %v193 = vld [vmem:[%s1 + $0x8] sm:$0xf]
      %v194 = vld [vmem:[%s1 + $0xc] sm:$0xf]
      %v195 = vld [vmem:[%s1 + $0x10] sm:$0xf]
      %v196 = vld [vmem:[%s1 + $0x14] sm:$0xf]
      %v197 = vld [vmem:[%s1 + $0x18] sm:$0xf]
      %v198 = vld [vmem:[%s1 + $0x1c] sm:$0xf]
      %v199 = vld [vmem:[%s1 + $0x20] sm:$0xf]
      %v200 = vld [vmem:[%s1 + $0x24] sm:$0xf]
      %v201 = vld [vmem:[%s1 + $0x28] sm:$0xf]
      %v202 = vld [vmem:[%s1 + $0x2c] sm:$0xf]
      %v203 = vld [vmem:[%s1 + $0x30] sm:$0xf]
      %v204 = vld [vmem:[%s1 + $0x34] sm:$0x3]
      %v205 = vld [vmem:[%s2] sm:$0x1]
      %v207 = vlaneseq
      %v208 = vshrl.u32 %v207, 7
      %v209 = vsub.s32 0, %v208
      %v210 = vrot.slane %v205, %v209
      %v228 = vunpack.c.l.b16 %v175
      %v229 = vunpack.c.l.b16 %v176
      %v230 = vunpack.c.l.b16 %v177
      %v231 = vunpack.c.l.b16 %v178
      %v232 = vunpack.c.l.b16 %v179
      %v233 = vunpack.c.l.b16 %v180
      %v234 = vunpack.c.l.b16 %v181
      %v235 = vunpack.c.l.b16 %v182
      %v236 = vunpack.c.l.b16 %v183
      %v237 = vunpack.c.l.b16 %v184
      %v238 = vunpack.c.l.b16 %v185
      %v239 = vunpack.c.l.b16 %v186
      %v240 = vunpack.c.l.b16 %v187
      %v241 = vunpack.c.l.b16 %v188
      %v242 = vunpack.c.l.b16 %v189
      %v243 = vunpack.c.l.b16 %v190
      %v244 = vpack.c.b16 %v229, %v228
      %v245 = vpack.c.b16 %v231, %v230
      %v246 = vpack.c.b16 %v233, %v232
      %v247 = vpack.c.b16 %v235, %v234
      %v248 = vpack.c.b16 %v237, %v236
      %v249 = vpack.c.b16 %v239, %v238
      %v250 = vpack.c.b16 %v241, %v240
      %v251 = vpack.c.b16 %v243, %v242
      %v266 = vunpack.c.l.b16 %v191
      %v267 = vunpack.c.l.b16 %v192
      %v268 = vunpack.c.l.b16 %v193
      %v269 = vunpack.c.l.b16 %v194
      %v270 = vunpack.c.l.b16 %v195
      %v271 = vunpack.c.l.b16 %v196
      %v272 = vunpack.c.l.b16 %v197
      %v273 = vunpack.c.l.b16 %v198
      %v274 = vunpack.c.l.b16 %v199
      %v275 = vunpack.c.l.b16 %v200
      %v276 = vunpack.c.l.b16 %v201
      %v277 = vunpack.c.l.b16 %v202
      %v278 = vunpack.c.l.b16 %v203
      %v279 = vunpack.c.l.b16 %v204
      %v280 = vpack.c.b16 %v267, %v266
      %v281 = vpack.c.b16 %v269, %v268
      %v282 = vpack.c.b16 %v271, %v270
      %v283 = vpack.c.b16 %v273, %v272
      %v284 = vpack.c.b16 %v275, %v274
      %v285 = vpack.c.b16 %v277, %v276
      %v286 = vpack.c.b16 %v279, %v278
      %vm293 = vcmask 883712
      %v295 = vsel %vm293, %v244, 0
      %v298 = vsel %vm293, %v245, 0
      %v301 = vsel %vm293, %v246, 0
      %v304 = vsel %vm293, %v247, 0
      %v307 = vsel %vm293, %v248, 0
      %v310 = vsel %vm293, %v249, 0
      %v313 = vsel %vm293, %v250, 0
      %v316 = vsel %vm293, %v251, 0
      %vm318 = vcmask 1045504
      %v320 = vsel %vm318, %v286, 0
      %322 = vmatprep.subr.bf16.mxu0 0
      %323 = vmatpush1.bf16.msra.mxu0 %v280
      %324 = vmatprep.subr.bf16.mxu0 0
      %325 = vmatpush1.bf16.msra.mxu0 %v281
      %326 = vmatprep.subr.bf16.mxu0 0
      %327 = vmatpush1.bf16.msra.mxu0 %v282
      %328 = vmatprep.subr.bf16.mxu0 0
      %329 = vmatpush1.bf16.msra.mxu0 %v283
      %330 = vmatprep.subr.bf16.mxu0 0
      %331 = vmatpush1.bf16.msra.mxu0 %v284
      %332 = vmatprep.subr.bf16.mxu0 0
      %333 = vmatpush1.bf16.msra.mxu0 %v285
      %334 = vmatprep.subr.bf16.mxu0 0
      %335 = vmatpush1.bf16.msra.mxu0 %v320
      %336 = vmatprep.subr.bf16.mxu0 0
      %337 = vmatpush1.bf16.msra.mxu0 0
      %338 = vmatprep.subr.bf16.mxu0 0
      %339 = vmatpush1.bf16.msra.mxu0 0
      %340 = vmatprep.subr.bf16.mxu0 0
      %341 = vmatpush1.bf16.msra.mxu0 0
      %342 = vmatprep.subr.bf16.mxu0 0
      %343 = vmatpush1.bf16.msra.mxu0 0
      %344 = vmatprep.subr.bf16.mxu0 0
      %345 = vmatpush1.bf16.msra.mxu0 0
      %346 = vmatprep.subr.bf16.mxu0 0
      %347 = vmatpush1.bf16.msra.mxu0 0
      %348 = vmatprep.subr.bf16.mxu0 0
      %349 = vmatpush1.bf16.msra.mxu0 0
      %350 = vmatprep.subr.bf16.mxu0 0
      %351 = vmatpush1.bf16.msra.mxu0 0
      %352 = vmatprep.subr.bf16.mxu0 0
      %353 = vmatpush1.bf16.msra.mxu0 0
      %354 = vmatprep.mubr.bf16.mxu0 0
      %355 = vmatmul.mubr.bf16.gmra.mrb[0].mxu0 %v295
      %v356 = vpop.f32.mrb[0].mxu0
      %v357 = vadd.f32 %v210, %v356
      %v358 = vpop.f32.mrb[0].mxu0
      %v359 = vpop.f32.mrb[0].mxu0
      %v360 = vadd.f32 %v210, %v359
      %v361 = vpop.f32.mrb[0].mxu0
      %362 = vmatprep.mubr.bf16.mxu0 0
      %363 = vmatmul.mubr.bf16.gmra.mrb[0].mxu0 %v298
      %v364 = vpop.f32.mrb[0].mxu0
      %v365 = vadd.f32 %v210, %v364
      %v366 = vpop.f32.mrb[0].mxu0
      %v367 = vpop.f32.mrb[0].mxu0
      %v368 = vadd.f32 %v210, %v367
      %v369 = vpop.f32.mrb[0].mxu0
      %370 = vmatprep.mubr.bf16.mxu0 0
      %371 = vmatmul.mubr.bf16.gmra.mrb[0].mxu0 %v301
      %v372 = vpop.f32.mrb[0].mxu0
      %v373 = vadd.f32 %v210, %v372
      %v374 = vpop.f32.mrb[0].mxu0
      %v375 = vpop.f32.mrb[0].mxu0
      %v376 = vadd.f32 %v210, %v375
      %v377 = vpop.f32.mrb[0].mxu0
      %378 = vmatprep.mubr.bf16.mxu0 0
      %379 = vmatmul.mubr.bf16.gmra.mrb[0].mxu0 %v304
      %v380 = vpop.f32.mrb[0].mxu0
      %v381 = vadd.f32 %v210, %v380
      %v382 = vpop.f32.mrb[0].mxu0
      %v383 = vpop.f32.mrb[0].mxu0
      %v384 = vadd.f32 %v210, %v383
      %v385 = vpop.f32.mrb[0].mxu0
      %386 = vmatprep.mubr.bf16.mxu0 0
      %387 = vmatmul.mubr.bf16.gmra.mrb[0].mxu0 %v307
      %v388 = vpop.f32.mrb[0].mxu0
      %v389 = vadd.f32 %v210, %v388
      %v390 = vpop.f32.mrb[0].mxu0
      %v391 = vpop.f32.mrb[0].mxu0
      %v392 = vadd.f32 %v210, %v391
      %v393 = vpop.f32.mrb[0].mxu0
      %394 = vmatprep.mubr.bf16.mxu0 0
      %395 = vmatmul.mubr.bf16.gmra.mrb[0].mxu0 %v310
      %v396 = vpop.f32.mrb[0].mxu0
      %v397 = vadd.f32 %v210, %v396
      %v398 = vpop.f32.mrb[0].mxu0
      %v399 = vpop.f32.mrb[0].mxu0
      %v400 = vadd.f32 %v210, %v399
      %v401 = vpop.f32.mrb[0].mxu0
      %402 = vmatprep.mubr.bf16.mxu0 0
      %403 = vmatmul.mubr.bf16.gmra.mrb[0].mxu0 %v313
      %v404 = vpop.f32.mrb[0].mxu0
      %v405 = vadd.f32 %v210, %v404
      %v406 = vpop.f32.mrb[0].mxu0
      %v407 = vpop.f32.mrb[0].mxu0
      %v408 = vadd.f32 %v210, %v407
      %v409 = vpop.f32.mrb[0].mxu0
      %410 = vmatprep.mubr.bf16.mxu0 0
      %411 = vmatmul.mubr.bf16.gmra.mrb[0].mxu0 %v316
      %v412 = vpop.f32.mrb[0].mxu0
      %v413 = vadd.f32 %v210, %v412
      %v414 = vpop.f32.mrb[0].mxu0
      %v415 = vpop.f32.mrb[0].mxu0
      %v416 = vadd.f32 %v210, %v415
      %v417 = vpop.f32.mrb[0].mxu0
      %418 = vdwg.mxu0
      %v419 = vmax.f32 %v357, 0.0
      %v420 = vmax.f32 %v360, 0.0
      %v421 = vmax.f32 %v365, 0.0
      %v422 = vmax.f32 %v368, 0.0
      %v423 = vmax.f32 %v373, 0.0
      %v424 = vmax.f32 %v376, 0.0
      %v425 = vmax.f32 %v381, 0.0
      %v426 = vmax.f32 %v384, 0.0
      %v427 = vmax.f32 %v389, 0.0
      %v428 = vmax.f32 %v392, 0.0
      %v429 = vmax.f32 %v397, 0.0
      %v430 = vmax.f32 %v400, 0.0
      %v431 = vmax.f32 %v405, 0.0
      %v432 = vmax.f32 %v408, 0.0
      %v433 = vmax.f32 %v413, 0.0
      %v434 = vmax.f32 %v416, 0.0
      %435 = vst [vmem:[%s172] sm:$0xff] %v419
      %436 = vst [vmem:[%s172 + $0x8] sm:$0xff] %v420
      %437 = vst [vmem:[%s172 + $0x10] sm:$0xff] %v421
      %438 = vst [vmem:[%s172 + $0x18] sm:$0xff] %v422
      %439 = vst [vmem:[%s172 + $0x20] sm:$0xff] %v423
      %440 = vst [vmem:[%s172 + $0x28] sm:$0xff] %v424
      %441 = vst [vmem:[%s172 + $0x30] sm:$0xff] %v425
      %442 = vst [vmem:[%s172 + $0x38] sm:$0xff] %v426
      %443 = vst [vmem:[%s172 + $0x40] sm:$0xff] %v427
      %444 = vst [vmem:[%s172 + $0x48] sm:$0xff] %v428
      %445 = vst [vmem:[%s172 + $0x50] sm:$0xff] %v429
      %446 = vst [vmem:[%s172 + $0x58] sm:$0xff] %v430
      %447 = vst [vmem:[%s172 + $0x60] sm:$0xff] %v431
      %448 = vst [vmem:[%s172 + $0x68] sm:$0xff] %v432
      %449 = vst [vmem:[%s172 + $0x70] sm:$0xff] %v433
      %450 = vst [vmem:[%s172 + $0x78] sm:$0xff] %v434
      %s451 = smul.u32 16, %s14
      %p452 = scmp.lt.s32.totalorder %s451, 31
      %s453 = scalar_select %p452, %s451, 31
      %s454 = smul.addr %s453, 8
      %s455 = scalar_lea.vmem %s3, %s454
      // Predicated region
      $region33: #{resblock_forward.2} parent=31 // pred_check
        %p456 = pneg %p100
      $region34: #{resblock_forward.2} parent=31 // pred_check_branch
        %458 = sbr.rel (%p456) target = $region36
      $region35: #{resblock_forward.2} parent=31 // pred_region
        %s459 = smul.u32 16, %s14
      $region36: #{resblock_forward.2} parent=31 // pred_fallthru
        _
    $region32: #{resblock_forward.2} parent=5 // pred_fallthru
      _
    %p460 = scmp.le.s32.totalorder 2, %s9
    // Predicated region
    $region37: #{resblock_forward.2} parent=5 // pred_check
      %p461 = pneg %p460
    $region38: #{resblock_forward.2} parent=5 // pred_check_branch
      %463 = sbr.rel (%p461) target = $region40
    $region39: #{resblock_forward.2} parent=5 // pred_region
      %s464 = ssub.s32 %s9, 2
      // Predicated region
      $region41: #{resblock_forward.2} parent=39 // pred_check
        %p465 = pneg %p106
      $region42: #{resblock_forward.2} parent=39 // pred_check_branch
        %467 = sbr.rel (%p465) target = $region44
      $region43: #{resblock_forward.2} parent=39 // pred_region
        %s468 = smul.u32 16, %s15
        %p469 = scmp.lt.s32.totalorder %s468, 31
        %s470 = scalar_select %p469, %s468, 31
        %s471 = smul.addr %s470, 8
        %s472 = scalar_lea.vmem %s3, %s471
      $region44: #{resblock_forward.2} parent=39 // pred_fallthru
        _
    $region40: #{resblock_forward.2} parent=5 // pred_fallthru
      _
  $region6: #{resblock_forward.2} parent=0 // loop_footer
    %s13 = sadd.s32 1, %s9
  $region7: #{resblock_forward.2} parent=0 // loop_footer_branch
    %8 = sbr.rel target = $region3
  $region8: #{resblock_forward.2} parent=0 // loop_exit
    _

// kernel: resblock_forward.3
$region0: #{resblock_forward.3}
  #allocation0 [shape = 'u32[]', space=smem, size = 0x4, offset = 0x4, fixed_abs, tag = 'smem constant byte address 0x4 - core index']
  #allocation1 [shape = 'u32[144,128]{1,0:T(1,128)}', space=vmem, size = 0x12000, scoped, tag = 'internal scratch']
  %s0 = inlined_call_operand.vmem [shape: bf16[256,216], index: 0, kind: input, shape index: {}]
  %s1 = inlined_call_operand.vmem [shape: bf16[216,128], index: 1, kind: input, shape index: {}]
  %s2 = inlined_call_operand.vmem [shape: f32[1,128], index: 2, kind: input, shape index: {}]
  %s3 = inlined_call_operand.vmem [shape: f32[256,128], index: 3, kind: input, shape index: {}, may-alias: {3,4}]
  %s4 = inlined_call_operand.vmem [shape: f32[256,128], index: 4, kind: output, shape index: {}, may-alias: {3,4}]
  %s5 = sld [smem:[#allocation0]]
  $region49: #{resblock_forward.3} parent=0
    _
  %s7 = ssub.s32 1, %s5
  %s8 = scalar_select 0, %s7, %s5
  loop: start=0, step=1, limit=4
  $region2: #{resblock_forward.3} parent=0 // loop_pre_header
    _
  $region3: #{resblock_forward.3} parent=0 // loop_header
    %s10 = sphi 0, %s14
    %p11 = scmp.ge.s32.totalorder %s10, 4
    %s20 = sphi 0, %s22
    %s23 = sphi 0, %s20
    %s24 = sphi 0, %s23
    %s40 = sphi 0, %s24
    %s44 = sphi 0, %s44
    %s46 = sphi 0, %s44
    %s47 = sphi 0, %s46
    %s61 = sphi 0, %s47
    %s65 = sphi 0, %s65
    %s67 = sphi 0, %s65
    %s68 = sphi 0, %s67
    %s82 = sphi 0, %s68
    %s88 = sphi 0, %s90
    %s91 = sphi 0, %s88
    %s92 = sphi 0, %s91
    %s108 = sphi 0, %s92
    %s114 = sphi 0, %s116
    %s117 = sphi 0, %s114
    %s118 = sphi 0, %s117
    %s134 = sphi 0, %s118
  $region4: #{resblock_forward.3} parent=0 // loop_header_branch
    %13 = sbr.rel (%p11) target = $region8
  $region5: #{resblock_forward.3} parent=0 // loop_body
    %s15 = ssub.s32 %s10, 1
    %s16 = ssub.s32 %s10, 2
    %s17 = sadd.s32 %s10, 1
    %s18 = ssub.s32 %s10, %s17
    %p19 = scmp.eq.s32.totalorder %s18, 0
    %s21 = sadd.s32 %s20, 1
    %s22 = scalar_select %p19, %s20, %s21
    %p25 = pneg %p19
    %p26 = scmp.eq.s32.totalorder %s10, 1
    %p27 = por %p25, %p26
    %p28 = scmp.ne.s32.totalorder %s20, %s23
    %p29 = scmp.eq.s32.totalorder %s10, 0
    %p30 = por %p28, %p29
    %p31 = scmp.ne.s32.totalorder %s20, %s23
    %p32 = scmp.eq.s32.totalorder %s15, 1
    %p33 = por %p31, %p32
    %p34 = scmp.ne.s32.totalorder %s23, %s24
    %p35 = scmp.eq.s32.totalorder %s15, 0
    %p36 = por %p34, %p35
    %p37 = scmp.ne.s32.totalorder %s23, %s24
    %p38 = scmp.eq.s32.totalorder %s16, 1
    %p39 = por %p37, %p38
    %p41 = scmp.ne.s32.totalorder %s24, %s40
    %p42 = scmp.eq.s32.totalorder %s16, 0
    %p43 = por %p41, %p42
    %s45 = sadd.s32 %s44, 1
    %p48 = scmp.eq.s32.totalorder %s10, 1
    %p49 = scmp.ne.s32.totalorder %s44, %s46
    %p50 = scmp.eq.s32.totalorder %s10, 0
    %p51 = por %p49, %p50
    %p52 = scmp.ne.s32.totalorder %s44, %s46
    %p53 = scmp.eq.s32.totalorder %s15, 1
    %p54 = por %p52, %p53
    %p55 = scmp.ne.s32.totalorder %s46, %s47
    %p56 = scmp.eq.s32.totalorder %s15, 0
    %p57 = por %p55, %p56
    %p58 = scmp.ne.s32.totalorder %s46, %s47
    %p59 = scmp.eq.s32.totalorder %s16, 1
    %p60 = por %p58, %p59
    %p62 = scmp.ne.s32.totalorder %s47, %s61
    %p63 = scmp.eq.s32.totalorder %s16, 0
    %p64 = por %p62, %p63
    %s66 = sadd.s32 %s65, 1
    %p69 = scmp.eq.s32.totalorder %s10, 1
    %p70 = scmp.ne.s32.totalorder %s65, %s67
    %p71 = scmp.eq.s32.totalorder %s10, 0
    %p72 = por %p70, %p71
    %p73 = scmp.ne.s32.totalorder %s65, %s67
    %p74 = scmp.eq.s32.totalorder %s15, 1
    %p75 = por %p73, %p74
    %p76 = scmp.ne.s32.totalorder %s67, %s68
    %p77 = scmp.eq.s32.totalorder %s15, 0
    %p78 = por %p76, %p77
    %p79 = scmp.ne.s32.totalorder %s67, %s68
    %p80 = scmp.eq.s32.totalorder %s16, 1
    %p81 = por %p79, %p80
    %p83 = scmp.ne.s32.totalorder %s68, %s82
    %p84 = scmp.eq.s32.totalorder %s16, 0
    %p85 = por %p83, %p84
    %s86 = ssub.s32 %s10, %s17
    %p87 = scmp.eq.s32.totalorder %s86, 0
    %s89 = sadd.s32 %s88, 1
    %s90 = scalar_select %p87, %s88, %s89
    %p93 = pneg %p87
    %p94 = scmp.eq.s32.totalorder %s10, 1
    %p95 = por %p93, %p94
    %p96 = scmp.ne.s32.totalorder %s88, %s91
    %p97 = scmp.eq.s32.totalorder %s10, 0
    %p98 = por %p96, %p97
    %p99 = scmp.ne.s32.totalorder %s88, %s91
    %p100 = scmp.eq.s32.totalorder %s15, 1
    %p101 = por %p99, %p100
    %p102 = scmp.ne.s32.totalorder %s91, %s92
    %p103 = scmp.eq.s32.totalorder %s15, 0
    %p104 = por %p102, %p103
    %p105 = scmp.ne.s32.totalorder %s91, %s92
    %p106 = scmp.eq.s32.totalorder %s16, 1
    %p107 = por %p105, %p106
    %p109 = scmp.ne.s32.totalorder %s92, %s108
    %p110 = scmp.eq.s32.totalorder %s16, 0
    %p111 = por %p109, %p110
    %s112 = ssub.s32 %s10, %s17
    %p113 = scmp.eq.s32.totalorder %s112, 0
    %s115 = sadd.s32 %s114, 1
    %s116 = scalar_select %p113, %s114, %s115
    %p119 = pneg %p113
    %p120 = scmp.eq.s32.totalorder %s10, 1
    %p121 = por %p119, %p120
    %p122 = scmp.ne.s32.totalorder %s114, %s117
    %p123 = scmp.eq.s32.totalorder %s10, 0
    %p124 = por %p122, %p123
    %p125 = scmp.ne.s32.totalorder %s114, %s117
    %p126 = scmp.eq.s32.totalorder %s15, 1
    %p127 = por %p125, %p126
    %p128 = scmp.ne.s32.totalorder %s117, %s118
    %p129 = scmp.eq.s32.totalorder %s15, 0
    %p130 = por %p128, %p129
    %p131 = scmp.ne.s32.totalorder %s117, %s118
    %p132 = scmp.eq.s32.totalorder %s16, 1
    %p133 = por %p131, %p132
    %p135 = scmp.ne.s32.totalorder %s118, %s134
    %p136 = scmp.eq.s32.totalorder %s16, 0
    %p137 = por %p135, %p136
    %p138 = scmp.le.s32.totalorder 1, %s10
    %p139 = scmp.lt.s32.totalorder %s10, 3
    %p140 = pnand %p138, %p139
    %p141 = pneg %p140
    // Predicated region
    $region9: #{resblock_forward.3} parent=5 // pred_check
      _
    $region10: #{resblock_forward.3} parent=5 // pred_check_branch
      %143 = sbr.rel (%p140) target = $region12
    $region11: #{resblock_forward.3} parent=5 // pred_region
      %s144 = ssub.s32 %s10, 1
      // Predicated region
      $region13: #{resblock_forward.3} parent=11 // pred_check
        %p145 = pneg %p57
      $region14: #{resblock_forward.3} parent=11 // pred_check_branch
        %147 = sbr.rel (%p145) target = $region16
      $region15: #{resblock_forward.3} parent=11 // pred_region
        _
      $region16: #{resblock_forward.3} parent=11 // pred_fallthru
        _
      // Predicated region
      $region17: #{resblock_forward.3} parent=11 // pred_check
        %p148 = pneg %p78
      $region18: #{resblock_forward.3} parent=11 // pred_check_branch
        %150 = sbr.rel (%p148) target = $region20
      $region19: #{resblock_forward.3} parent=11 // pred_region
        _
      $region20: #{resblock_forward.3} parent=11 // pred_fallthru
        _
    $region12: #{resblock_forward.3} parent=5 // pred_fallthru
      _
    %p151 = scmp.lt.s32.totalorder %s10, 2
    // Predicated region
    $region21: #{resblock_forward.3} parent=5 // pred_check
      %p152 = pneg %p151
    $region22: #{resblock_forward.3} parent=5 // pred_check_branch
      %154 = sbr.rel (%p152) target = $region24
    $region23: #{resblock_forward.3} parent=5 // pred_region
      // Predicated region
      $region25: #{resblock_forward.3} parent=23 // pred_check
        %p155 = pneg %p30
      $region26: #{resblock_forward.3} parent=23 // pred_check_branch
        %157 = sbr.rel (%p155) target = $region28
      $region27: #{resblock_forward.3} parent=23 // pred_region
        %s158 = smul.u32 16, %s10
        %p159 = scmp.lt.s32.totalorder %s158, 31
        %s160 = scalar_select %p159, %s158, 31
        %s161 = smul.addr %s160, 2
        %s162 = smul.addr %s161, 4
        %s163 = scalar_lea.vmem %s0, %s162
        %s164 = smul.u32 16, %s10
      $region28: #{resblock_forward.3} parent=23 // pred_fallthru
        _
      // Predicated region
      $region29: #{resblock_forward.3} parent=23 // pred_check
        %p165 = pneg %p98
      $region30: #{resblock_forward.3} parent=23 // pred_check_branch
        %167 = sbr.rel (%p165) target = $region32
      $region31: #{resblock_forward.3} parent=23 // pred_region
        %s168 = smul.u32 16, %s10
        %p169 = scmp.lt.s32.totalorder %s168, 31
        %s170 = scalar_select %p169, %s168, 31
        %s171 = smul.addr %s170, 8
        %s172 = scalar_lea.vmem %s3, %s171
        %s173 = smul.u32 16, %s10
      $region32: #{resblock_forward.3} parent=23 // pred_fallthru
        _
    $region24: #{resblock_forward.3} parent=5 // pred_fallthru
      _
    %p174 = scmp.le.s32.totalorder 1, %s10
    %p175 = scmp.lt.s32.totalorder %s10, 3
    %p176 = pnand %p174, %p175
    %p177 = pneg %p176
    // Predicated region
    $region33: #{resblock_forward.3} parent=5 // pred_check
      _
    $region34: #{resblock_forward.3} parent=5 // pred_check_branch
      %179 = sbr.rel (%p176) target = $region36
    $region35: #{resblock_forward.3} parent=5 // pred_region
      %s180 = ssub.s32 %s10, 1
      %s181 = smul.u32 16, %s15
      %p182 = scmp.lt.s32.totalorder %s181, 31
      %s183 = scalar_select %p182, %s181, 31
      %s184 = smul.addr %s183, 2
      %s185 = smul.addr %s184, 4
      %s186 = scalar_lea.vmem %s0, %s185
      %p187 = pneg %p36
      %p188 = pneg %p33
      %p189 = pneg %p57
      %p190 = pneg %p54
      %p191 = pneg %p78
      %p192 = pneg %p75
      %s193 = smul.u32 16, %s15
      %p194 = scmp.lt.s32.totalorder %s193, 31
      %s195 = scalar_select %p194, %s193, 31
      %s196 = smul.addr %s195, 8
      %s197 = scalar_lea.vmem %s3, %s196
      %p198 = pneg %p104
      %p199 = pneg %p101
      %p200 = pneg %p130
      %p201 = pneg %p127
      %s202 = smul.u32 16, %s15
      %p203 = scmp.lt.s32.totalorder %s202, 31
      %s204 = scalar_select %p203, %s202, 31
      %s205 = smul.addr %s204, 8
      %s206 = scalar_lea.vmem %s4, %s205
      %s207 = smul.u32 16, %s15
      %p208 = scmp.lt.s32.totalorder %s207, 31
      %s209 = scalar_select %p208, %s207, 31
      %s210 = smul.addr %s209, 2
      %s211 = smul.addr %s210, 4
      %s212 = scalar_lea.vmem %s0, %s211
      %s213 = smul.u32 16, %s15
      %s214 = smul.u32 16, %s15
      %p215 = scmp.lt.s32.totalorder %s214, 31
      %s216 = scalar_select %p215, %s214, 31
      %s217 = smul.addr %s216, 8
      %s218 = scalar_lea.vmem %s3, %s217
      %s219 = smul.u32 16, %s15
      %s220 = smul.u32 16, %s15
      %p221 = scmp.lt.s32.totalorder %s220, 31
      %s222 = scalar_select %p221, %s220, 31
      %s223 = smul.addr %s222, 8
      %s224 = scalar_lea.vmem %s4, %s223
      %s225 = smul.u32 16, %s15
      %v227 = vld [vmem:[%s212] sm:$0xff]
      %v228 = vld [vmem:[%s212 + $0x8] sm:$0xff]
      %v229 = vld [vmem:[%s212 + $0x10] sm:$0xff]
      %v230 = vld [vmem:[%s212 + $0x18] sm:$0xff]
      %v231 = vld [vmem:[%s212 + $0x20] sm:$0xff]
      %v232 = vld [vmem:[%s212 + $0x28] sm:$0xff]
      %v233 = vld [vmem:[%s212 + $0x30] sm:$0xff]
      %v234 = vld [vmem:[%s212 + $0x38] sm:$0xff]
      %v235 = vld [vmem:[%s212 + $0x40] sm:$0xff]
      %v236 = vld [vmem:[%s212 + $0x48] sm:$0xff]
      %v237 = vld [vmem:[%s212 + $0x50] sm:$0xff]
      %v238 = vld [vmem:[%s212 + $0x58] sm:$0xff]
      %v239 = vld [vmem:[%s212 + $0x60] sm:$0xff]
      %v240 = vld [vmem:[%s212 + $0x68] sm:$0xff]
      %v241 = vld [vmem:[%s212 + $0x70] sm:$0xff]
      %v242 = vld [vmem:[%s212 + $0x78] sm:$0xff]
      %v243 = vld [vmem:[%s1] sm:$0xf]
      %v244 = vld [vmem:[%s1 + $0x4] sm:$0xf]
      %v245 = vld [vmem:[%s1 + $0x8] sm:$0xf]
      %v246 = vld [vmem:[%s1 + $0xc] sm:$0xf]
      %v247 = vld [vmem:[%s1 + $0x10] sm:$0xf]
      %v248 = vld [vmem:[%s1 + $0x14] sm:$0xf]
      %v249 = vld [vmem:[%s1 + $0x18] sm:$0xf]
      %v250 = vld [vmem:[%s1 + $0x1c] sm:$0xf]
      %v251 = vld [vmem:[%s1 + $0x20] sm:$0xf]
      %v252 = vld [vmem:[%s1 + $0x24] sm:$0xf]
      %v253 = vld [vmem:[%s1 + $0x28] sm:$0xf]
      %v254 = vld [vmem:[%s1 + $0x2c] sm:$0xf]
      %v255 = vld [vmem:[%s1 + $0x30] sm:$0xf]
      %v256 = vld [vmem:[%s1 + $0x34] sm:$0xf]
      %v257 = vld [vmem:[%s1 + $0x38] sm:$0xf]
      %v258 = vld [vmem:[%s1 + $0x3c] sm:$0xf]
      %v259 = vld [vmem:[%s1 + $0x40] sm:$0xf]
      %v260 = vld [vmem:[%s1 + $0x44] sm:$0xf]
      %v261 = vld [vmem:[%s1 + $0x48] sm:$0xf]
      %v262 = vld [vmem:[%s1 + $0x4c] sm:$0xf]
      %v263 = vld [vmem:[%s1 + $0x50] sm:$0xf]
      %v264 = vld [vmem:[%s1 + $0x54] sm:$0xf]
      %v265 = vld [vmem:[%s1 + $0x58] sm:$0xf]
      %v266 = vld [vmem:[%s1 + $0x5c] sm:$0xf]
      %v267 = vld [vmem:[%s1 + $0x60] sm:$0xf]
      %v268 = vld [vmem:[%s1 + $0x64] sm:$0xf]
      %v269 = vld [vmem:[%s1 + $0x68] sm:$0xf]
      %v270 = vld [vmem:[%s218] sm:$0xff]
      %v271 = vld [vmem:[%s218 + $0x8] sm:$0xff]
      %v272 = vld [vmem:[%s218 + $0x10] sm:$0xff]
      %v273 = vld [vmem:[%s218 + $0x18] sm:$0xff]
      %v274 = vld [vmem:[%s218 + $0x20] sm:$0xff]
      %v275 = vld [vmem:[%s218 + $0x28] sm:$0xff]
      %v276 = vld [vmem:[%s218 + $0x30] sm:$0xff]
      %v277 = vld [vmem:[%s218 + $0x38] sm:$0xff]
      %v278 = vld [vmem:[%s218 + $0x40] sm:$0xff]
      %v279 = vld [vmem:[%s218 + $0x48] sm:$0xff]
      %v280 = vld [vmem:[%s218 + $0x50] sm:$0xff]
      %v281 = vld [vmem:[%s218 + $0x58] sm:$0xff]
      %v282 = vld [vmem:[%s218 + $0x60] sm:$0xff]
      %v283 = vld [vmem:[%s218 + $0x68] sm:$0xff]
      %v284 = vld [vmem:[%s218 + $0x70] sm:$0xff]
      %v285 = vld [vmem:[%s218 + $0x78] sm:$0xff]
      %v286 = vld [vmem:[%s2] sm:$0x1]
      %v288 = vlaneseq
      %v289 = vshrl.u32 %v288, 7
      %v290 = vsub.s32 0, %v289
      %v291 = vrot.slane %v286, %v290
      %v309 = vunpack.c.l.b16 %v227
      %v310 = vunpack.c.h.b16 %v227
      %v311 = vunpack.c.l.b16 %v228
      %v312 = vunpack.c.h.b16 %v228
      %v313 = vunpack.c.l.b16 %v229
      %v314 = vunpack.c.h.b16 %v229
      %v315 = vunpack.c.l.b16 %v230
      %v316 = vunpack.c.h.b16 %v230
      %v317 = vunpack.c.l.b16 %v231
      %v318 = vunpack.c.h.b16 %v231
      %v319 = vunpack.c.l.b16 %v232
      %v320 = vunpack.c.h.b16 %v232
      %v321 = vunpack.c.l.b16 %v233
      %v322 = vunpack.c.h.b16 %v233
      %v323 = vunpack.c.l.b16 %v234
      %v324 = vunpack.c.h.b16 %v234
      %v325 = vunpack.c.l.b16 %v235
      %v326 = vunpack.c.h.b16 %v235
      %v327 = vunpack.c.l.b16 %v236
      %v328 = vunpack.c.h.b16 %v236
      %v329 = vunpack.c.l.b16 %v237
      %v330 = vunpack.c.h.b16 %v237
      %v331 = vunpack.c.l.b16 %v238
      %v332 = vunpack.c.h.b16 %v238
      %v333 = vunpack.c.l.b16 %v239
      %v334 = vunpack.c.h.b16 %v239
      %v335 = vunpack.c.l.b16 %v240
      %v336 = vunpack.c.h.b16 %v240
      %v337 = vunpack.c.l.b16 %v241
      %v338 = vunpack.c.h.b16 %v241
      %v339 = vunpack.c.l.b16 %v242
      %v340 = vunpack.c.h.b16 %v242
      %v341 = vpack.c.b16 %v311, %v309
      %v342 = vpack.c.b16 %v312, %v310
      %v343 = vpack.c.b16 %v315, %v313
      %v344 = vpack.c.b16 %v316, %v314
      %v345 = vpack.c.b16 %v319, %v317
      %v346 = vpack.c.b16 %v320, %v318
      %v347 = vpack.c.b16 %v323, %v321
      %v348 = vpack.c.b16 %v324, %v322
      %v349 = vpack.c.b16 %v327, %v325
      %v350 = vpack.c.b16 %v328, %v326
      %v351 = vpack.c.b16 %v331, %v329
      %v352 = vpack.c.b16 %v332, %v330
      %v353 = vpack.c.b16 %v335, %v333
      %v354 = vpack.c.b16 %v336, %v334
      %v355 = vpack.c.b16 %v339, %v337
      %v356 = vpack.c.b16 %v340, %v338
      %v392 = vunpack.c.l.b16 %v243
      %v393 = vunpack.c.l.b16 %v244
      %v394 = vunpack.c.l.b16 %v245
      %v395 = vunpack.c.l.b16 %v246
      %v396 = vunpack.c.l.b16 %v247
      %v397 = vunpack.c.l.b16 %v248
      %v398 = vunpack.c.l.b16 %v249
      %v399 = vunpack.c.l.b16 %v250
      %v400 = vunpack.c.l.b16 %v251
      %v401 = vunpack.c.l.b16 %v252
      %v402 = vunpack.c.l.b16 %v253
      %v403 = vunpack.c.l.b16 %v254
      %v404 = vunpack.c.l.b16 %v255
      %v405 = vunpack.c.l.b16 %v256
      %v406 = vunpack.c.l.b16 %v257
      %v407 = vunpack.c.l.b16 %v258
      %v408 = vunpack.c.l.b16 %v259
      %v409 = vunpack.c.l.b16 %v260
      %v410 = vunpack.c.l.b16 %v261
      %v411 = vunpack.c.l.b16 %v262
      %v412 = vunpack.c.l.b16 %v263
      %v413 = vunpack.c.l.b16 %v264
      %v414 = vunpack.c.l.b16 %v265
      %v415 = vunpack.c.l.b16 %v266
      %v416 = vunpack.c.l.b16 %v267
      %v417 = vunpack.c.l.b16 %v268
      %v418 = vunpack.c.l.b16 %v269
      %v419 = vpack.c.b16 %v393, %v392
      %v420 = vpack.c.b16 %v395, %v394
      %v421 = vpack.c.b16 %v397, %v396
      %v422 = vpack.c.b16 %v399, %v398
      %v423 = vpack.c.b16 %v401, %v400
      %v424 = vpack.c.b16 %v403, %v402
      %v425 = vpack.c.b16 %v405, %v404
      %v426 = vpack.c.b16 %v407, %v406
      %v427 = vpack.c.b16 %v409, %v408
      %v428 = vpack.c.b16 %v411, %v410
      %v429 = vpack.c.b16 %v413, %v412
      %v430 = vpack.c.b16 %v415, %v414
      %v431 = vpack.c.b16 %v417, %v416
      %v432 = vpack.c.b16 %v418, %v418
      %vm446 = vcmask 719872
      %v448 = vsel %vm446, %v342, 0
      %v451 = vsel %vm446, %v344, 0
      %v454 = vsel %vm446, %v346, 0
      %v457 = vsel %vm446, %v348, 0
      %v460 = vsel %vm446, %v350, 0
      %v463 = vsel %vm446, %v352, 0
      %v466 = vsel %vm446, %v354, 0
      %v469 = vsel %vm446, %v356, 0
      %vm471 = vcmask 1043456
      %v473 = vsel %vm471, %v432, 0
      %475 = vmatprep.subr.bf16.mxu0 0
      %476 = vmatpush1.bf16.msra.mxu0 %v419
      %477 = vmatprep.subr.bf16.mxu0 0
      %478 = vmatpush1.bf16.msra.mxu0 %v420
      %479 = vmatprep.subr.bf16.mxu0 0
      %480 = vmatpush1.bf16.msra.mxu0 %v421
      %481 = vmatprep.subr.bf16.mxu0 0
      %482 = vmatpush1.bf16.msra.mxu0 %v422
      %483 = vmatprep.subr.bf16.mxu0 0
      %484 = vmatpush1.bf16.msra.mxu0 %v423
      %485 = vmatprep.subr.bf16.mxu0 0
      %486 = vmatpush1.bf16.msra.mxu0 %v424
      %487 = vmatprep.subr.bf16.mxu0 0
      %488 = vmatpush1.bf16.msra.mxu0 %v425
      %489 = vmatprep.subr.bf16.mxu0 0
      %490 = vmatpush1.bf16.msra.mxu0 %v426
      %491 = vmatprep.subr.bf16.mxu0 0
      %492 = vmatpush1.bf16.msra.mxu0 %v427
      %493 = vmatprep.subr.bf16.mxu0 0
      %494 = vmatpush1.bf16.msra.mxu0 %v428
      %495 = vmatprep.subr.bf16.mxu0 0
      %496 = vmatpush1.bf16.msra.mxu0 %v429
      %497 = vmatprep.subr.bf16.mxu0 0
      %498 = vmatpush1.bf16.msra.mxu0 %v430
      %499 = vmatprep.subr.bf16.mxu0 0
      %500 = vmatpush1.bf16.msra.mxu0 %v431
      %501 = vmatprep.subr.bf16.mxu0 0
      %502 = vmatpush1.bf16.msra.mxu0 %v473
      %503 = vmatprep.subr.bf16.mxu0 0
      %504 = vmatpush1.bf16.msra.mxu0 0
      %505 = vmatprep.subr.bf16.mxu0 0
      %506 = vmatpush1.bf16.msra.mxu0 0
      %507 = vmatprep.mubr.bf16.mxu0 %v448
      %508 = vmatmul.mubr.bf16.gmra.mrb[0].mxu0 %v341
      %v509 = vpop.f32.mrb[0].mxu0
      %v510 = vadd.f32 %v291, %v509
      %v511 = vpop.f32.mrb[0].mxu0
      %v512 = vpop.f32.mrb[0].mxu0
      %v513 = vadd.f32 %v291, %v512
      %v514 = vpop.f32.mrb[0].mxu0
      %515 = vmatprep.mubr.bf16.mxu0 %v451
      %516 = vmatmul.mubr.bf16.gmra.mrb[0].mxu0 %v343
      %v517 = vpop.f32.mrb[0].mxu0
      %v518 = vadd.f32 %v291, %v517
      %v519 = vpop.f32.mrb[0].mxu0
      %v520 = vpop.f32.mrb[0].mxu0
      %v521 = vadd.f32 %v291, %v520
      %v522 = vpop.f32.mrb[0].mxu0
      %523 = vmatprep.mubr.bf16.mxu0 %v454
      %524 = vmatmul.mubr.bf16.gmra.mrb[0].mxu0 %v345
      %v525 = vpop.f32.mrb[0].mxu0
      %v526 = vadd.f32 %v291, %v525
      %v527 = vpop.f32.mrb[0].mxu0
      %v528 = vpop.f32.mrb[0].mxu0
      %v529 = vadd.f32 %v291, %v528
      %v530 = vpop.f32.mrb[0].mxu0
      %531 = vmatprep.mubr.bf16.mxu0 %v457
      %532 = vmatmul.mubr.bf16.gmra.mrb[0].mxu0 %v347
      %v533 = vpop.f32.mrb[0].mxu0
      %v534 = vadd.f32 %v291, %v533
      %v535 = vpop.f32.mrb[0].mxu0
      %v536 = vpop.f32.mrb[0].mxu0
      %v537 = vadd.f32 %v291, %v536
      %v538 = vpop.f32.mrb[0].mxu0
      %539 = vmatprep.mubr.bf16.mxu0 %v460
      %540 = vmatmul.mubr.bf16.gmra.mrb[0].mxu0 %v349
      %v541 = vpop.f32.mrb[0].mxu0
      %v542 = vadd.f32 %v291, %v541
      %v543 = vpop.f32.mrb[0].mxu0
      %v544 = vpop.f32.mrb[0].mxu0
      %v545 = vadd.f32 %v291, %v544
      %v546 = vpop.f32.mrb[0].mxu0
      %547 = vmatprep.mubr.bf16.mxu0 %v463
      %548 = vmatmul.mubr.bf16.gmra.mrb[0].mxu0 %v351
      %v549 = vpop.f32.mrb[0].mxu0
      %v550 = vadd.f32 %v291, %v549
      %v551 = vpop.f32.mrb[0].mxu0
      %v552 = vpop.f32.mrb[0].mxu0
      %v553 = vadd.f32 %v291, %v552
      %v554 = vpop.f32.mrb[0].mxu0
      %555 = vmatprep.mubr.bf16.mxu0 %v466
      %556 = vmatmul.mubr.bf16.gmra.mrb[0].mxu0 %v353
      %v557 = vpop.f32.mrb[0].mxu0
      %v558 = vadd.f32 %v291, %v557
      %v559 = vpop.f32.mrb[0].mxu0
      %v560 = vpop.f32.mrb[0].mxu0
      %v561 = vadd.f32 %v291, %v560
      %v562 = vpop.f32.mrb[0].mxu0
      %563 = vmatprep.mubr.bf16.mxu0 %v469
      %564 = vmatmul.mubr.bf16.gmra.mrb[0].mxu0 %v355
      %v565 = vpop.f32.mrb[0].mxu0
      %v566 = vadd.f32 %v291, %v565
      %v567 = vpop.f32.mrb[0].mxu0
      %v568 = vpop.f32.mrb[0].mxu0
      %v569 = vadd.f32 %v291, %v568
      %v570 = vpop.f32.mrb[0].mxu0
      %571 = vdwg.mxu0
      %v572 = vmax.f32 %v510, 0.0
      %v573 = vmax.f32 %v513, 0.0
      %v574 = vmax.f32 %v518, 0.0
      %v575 = vmax.f32 %v521, 0.0
      %v576 = vmax.f32 %v526, 0.0
      %v577 = vmax.f32 %v529, 0.0
      %v578 = vmax.f32 %v534, 0.0
      %v579 = vmax.f32 %v537, 0.0
      %v580 = vmax.f32 %v542, 0.0
      %v581 = vmax.f32 %v545, 0.0
      %v582 = vmax.f32 %v550, 0.0
      %v583 = vmax.f32 %v553, 0.0
      %v584 = vmax.f32 %v558, 0.0
      %v585 = vmax.f32 %v561, 0.0
      %v586 = vmax.f32 %v566, 0.0
      %v587 = vmax.f32 %v569, 0.0
      %v588 = vadd.f32 %v270, %v572
      %v589 = vadd.f32 %v271, %v573
      %v590 = vadd.f32 %v272, %v574
      %v591 = vadd.f32 %v273, %v575
      %v592 = vadd.f32 %v274, %v576
      %v593 = vadd.f32 %v275, %v577
      %v594 = vadd.f32 %v276, %v578
      %v595 = vadd.f32 %v277, %v579
      %v596 = vadd.f32 %v278, %v580
      %v597 = vadd.f32 %v279, %v581
      %v598 = vadd.f32 %v280, %v582
      %v599 = vadd.f32 %v281, %v583
      %v600 = vadd.f32 %v282, %v584
      %v601 = vadd.f32 %v283, %v585
      %v602 = vadd.f32 %v284, %v586
      %v603 = vadd.f32 %v285, %v587
      %604 = vst [vmem:[%s224] sm:$0xff] %v588
      %605 = vst [vmem:[%s224 + $0x8] sm:$0xff] %v589
      %606 = vst [vmem:[%s224 + $0x10] sm:$0xff] %v590
      %607 = vst [vmem:[%s224 + $0x18] sm:$0xff] %v591
      %608 = vst [vmem:[%s224 + $0x20] sm:$0xff] %v592
      %609 = vst [vmem:[%s224 + $0x28] sm:$0xff] %v593
      %610 = vst [vmem:[%s224 + $0x30] sm:$0xff] %v594
      %611 = vst [vmem:[%s224 + $0x38] sm:$0xff] %v595
      %612 = vst [vmem:[%s224 + $0x40] sm:$0xff] %v596
      %613 = vst [vmem:[%s224 + $0x48] sm:$0xff] %v597
      %614 = vst [vmem:[%s224 + $0x50] sm:$0xff] %v598
      %615 = vst [vmem:[%s224 + $0x58] sm:$0xff] %v599
      %616 = vst [vmem:[%s224 + $0x60] sm:$0xff] %v600
      %617 = vst [vmem:[%s224 + $0x68] sm:$0xff] %v601
      %618 = vst [vmem:[%s224 + $0x70] sm:$0xff] %v602
      %619 = vst [vmem:[%s224 + $0x78] sm:$0xff] %v603
      %s620 = smul.u32 16, %s15
      %p621 = scmp.lt.s32.totalorder %s620, 31
      %s622 = scalar_select %p621, %s620, 31
      %s623 = smul.addr %s622, 8
      %s624 = scalar_lea.vmem %s4, %s623
      // Predicated region
      $region37: #{resblock_forward.3} parent=35 // pred_check
        %p625 = pneg %p127
      $region38: #{resblock_forward.3} parent=35 // pred_check_branch
        %627 = sbr.rel (%p625) target = $region40
      $region39: #{resblock_forward.3} parent=35 // pred_region
        %s628 = smul.u32 16, %s15
      $region40: #{resblock_forward.3} parent=35 // pred_fallthru
        _
    $region36: #{resblock_forward.3} parent=5 // pred_fallthru
      _
    %p629 = scmp.le.s32.totalorder 2, %s10
    // Predicated region
    $region41: #{resblock_forward.3} parent=5 // pred_check
      %p630 = pneg %p629
    $region42: #{resblock_forward.3} parent=5 // pred_check_branch
      %632 = sbr.rel (%p630) target = $region44
    $region43: #{resblock_forward.3} parent=5 // pred_region
      %s633 = ssub.s32 %s10, 2
      // Predicated region
      $region45: #{resblock_forward.3} parent=43 // pred_check
        %p634 = pneg %p133
      $region46: #{resblock_forward.3} parent=43 // pred_check_branch
        %636 = sbr.rel (%p634) target = $region48
      $region47: #{resblock_forward.3} parent=43 // pred_region
        %s637 = smul.u32 16, %s16
        %p638 = scmp.lt.s32.totalorder %s637, 31
        %s639 = scalar_select %p638, %s637, 31
        %s640 = smul.addr %s639, 8
        %s641 = scalar_lea.vmem %s4, %s640
      $region48: #{resblock_forward.3} parent=43 // pred_fallthru
        _
    $region44: #{resblock_forward.3} parent=5 // pred_fallthru
      _
  $region6: #{resblock_forward.3} parent=0 // loop_footer
    %s14 = sadd.s32 1, %s10
  $region7: #{resblock_forward.3} parent=0 // loop_footer_branch
    %9 = sbr.rel target = $region3
  $region8: #{resblock_forward.3} parent=0 // loop_exit
    _

</llo_original>
